<compile_context>
chip_gen: v7x
topology: tpu7x:2x2x1
jax: 0.10.0
libtpu: 0.0.40
codegen_flags: <defaults>
</compile_context>

<pallas_src>
import jax
import jax.numpy as jnp
from jax.experimental import pallas as pl
from jax.experimental.pallas import tpu as pltpu

# Large finite negative (not -inf) so the online-softmax recurrence never forms
# inf - inf = NaN; masked logits still underflow to exactly 0 after exp.
_MASK_BIAS = -1e30


def _flash_attention_kernel(q_ref, k_ref, v_ref, kvb_ref, o_ref,
                            qs_sc, m_sc, l_sc, acc_sc):
    """One (batch, head-group, q-tile) cell, iterated over KV tiles (innermost).

    q_ref  : (1, HG, TL, D)   resident across the KV axis
    k_ref  : (1, HG, TS, D)   streamed
    v_ref  : (1, HG, TS, D)   streamed
    kvb_ref: (1, 1, TS)       additive key-mask bias (0 or _MASK_BIAS), f32
    o_ref  : (1, HG, TL, D)   resident across the KV axis
    qs_sc  : (HG, TL, D)      q * 1/sqrt(D), computed once per q-tile (q dtype)
    m_sc   : (HG, TL, 1)      running max          (f32)
    l_sc   : (HG, TL, 1)      running denominator  (f32)
    acc_sc : (HG, TL, D)      running numerator    (f32)
    """
    si = pl.program_id(3)

    @pl.when(si == 0)
    def _init():
        # Fold the softmax temperature into q ONCE per q-tile; q is resident
        # across the KV axis so doing this per KV step is redundant VPU work.
        d = q_ref.shape[-1]
        qs_sc[...] = (q_ref[0] * (1.0 / (d ** 0.5))).astype(qs_sc.dtype)
        m_sc[...] = jnp.full_like(m_sc, _MASK_BIAS)
        l_sc[...] = jnp.zeros_like(l_sc)
        acc_sc[...] = jnp.zeros_like(acc_sc)

    # Per-head QK^T on the MXU; contraction over the last dim of both operands
    # (RHS-transposed form, no per-head XLU transpose of k).
    s = jnp.einsum('hld,hsd->hls', qs_sc[...], k_ref[0],
                   preferred_element_type=jnp.float32)        # (HG, TL, TS) f32

    # Additive key-mask bias, broadcast over heads and query rows.  (The
    # per-query-row bias of the reference cancels in softmax and is omitted.)
    s = s + kvb_ref[0]

    # Online softmax update.
    m_prev = m_sc[...]                                        # (HG, TL, 1)
    m_new = jnp.maximum(m_prev, jnp.max(s, axis=-1, keepdims=True))
    alpha = jnp.exp(m_prev - m_new)

    if v_ref.dtype == jnp.bfloat16:
        # bf16 fast path: bf16 exp doubles EUP throughput on v6e/v7x and feeds
        # the PV matmul directly; accumulation stays f32.
        p = jnp.exp((s - m_new).astype(jnp.bfloat16))         # (HG, TL, TS) bf16
        p_sum = jnp.sum(p.astype(jnp.float32), axis=-1, keepdims=True)
    else:
        p = jnp.exp(s - m_new)                                # (HG, TL, TS) f32
        p_sum = jnp.sum(p, axis=-1, keepdims=True)

    l_sc[...] = alpha * l_sc[...] + p_sum
    acc_sc[...] = alpha * acc_sc[...] + jnp.einsum(
        'hls,hsd->hld', p.astype(v_ref.dtype), v_ref[0],
        preferred_element_type=jnp.float32)                   # (HG, TL, D) f32
    m_sc[...] = m_new

    @pl.when(si == pl.num_programs(3) - 1)
    def _finalize():
        # One EUP approx reciprocal + one Newton step (no (L,S)-wide divide).
        l = l_sc[...]
        inv_l = pl.reciprocal(l, approx=True)
        inv_l = inv_l * (2.0 - l * inv_l)
        o_ref[0] = (acc_sc[...] * inv_l).astype(o_ref.dtype)


def _pick_tile(dim, candidates):
    """Largest candidate dividing `dim`, else the full extent (both choices
    satisfy the (8, 128) BlockSpec divisibility rule)."""
    for c in candidates:
        if dim % c == 0:
            return c
    return dim


def _divisors_desc(n):
    return [d for d in range(n, 0, -1) if n % d == 0]


def _vmem_budget_bytes():
    """Conservative scoped-VMEM budget: ~3/4 of physical VMEM so Mosaic's
    internal scratch and double buffers keep headroom.
    v5e/v6e (128 MiB) -> 96 MiB; v7x (64 MiB) or unknown -> 48 MiB."""
    cap = 64 * 1024 * 1024
    try:
        cap = int(pltpu.get_tpu_info().vmem_capacity_bytes)
    except Exception:
        pass
    return min(cap * 3 // 4, 96 * 1024 * 1024)


def _estimate_vmem_bytes(hg, tl, ts, d, itemsize, kv_buffers):
    q_o = 2 * 2 * hg * tl * d * itemsize            # q + o blocks, double-buffered
    k_v = 2 * kv_buffers * hg * ts * d * itemsize   # k + v blocks
    scratch = hg * tl * d * (4 + itemsize) + 2 * hg * tl * 4  # acc + scaled q + m,l
    interm = 2 * hg * tl * ts * 4                   # s / p style f32 intermediates
    return q_o + k_v + scratch + interm


def full_attention_heads_major(q, k, v, kv_bias, *, block_q=None, block_kv=None,
                               head_group=None, kv_buffers=None,
                               vmem_limit_bytes=None):
    """Heads-major attention (no layout transposes).

    q: [N,H,L,D], k/v: [N,H,S,D], kv_bias: [N,1,S] f32 (0 or _MASK_BIAS).
    Returns [N,H,L,D].  bf16 q/k/v is the intended fast path.
    """
    N, H, L, D = q.shape
    S = k.shape[2]
    itemsize = jnp.dtype(q.dtype).itemsize

    budget = _vmem_budget_bytes() if vmem_limit_bytes is None else vmem_limit_bytes

    ts = block_kv or _pick_tile(S, (256, 128))
    tl = block_q or _pick_tile(L, (512, 256, 128))   # bigger q tile => K/V reuse

    # Head-group axis: (a) keeps per-step residency within the VMEM budget
    # (critical on v7x's 64 MiB), (b) guarantees >= 2 parallel grid units so
    # both v7x TensorCores get work even when N * (L // tl) == 1.
    if head_group is None:
        hg_candidates = _divisors_desc(H)
        if N * (L // tl) < 2 and H > 1:
            hg_candidates = [d for d in hg_candidates if d <= H // 2] or [1]
        hg = hg_candidates[-1]
        for cand in hg_candidates:
            if _estimate_vmem_bytes(cand, tl, ts, D, itemsize, 2) <= budget:
                hg = cand
                break
    else:
        hg = head_group
    assert H % hg == 0 and L % tl == 0 and S % ts == 0

    n_kv = S // ts

    # Deeper K/V buffering only where there is VMEM headroom (v5e/v6e) and
    # enough KV steps for it to matter.
    if kv_buffers is None:
        deep_ok = (budget >= 80 * 1024 * 1024 and n_kv > 3 and
                   _estimate_vmem_bytes(hg, tl, ts, D, itemsize, 3) <= budget)
        kv_buffers = 3 if deep_ok else 2

    kv_pipeline_mode = None
    if kv_buffers > 2 and hasattr(pl, "Buffered"):
        kv_pipeline_mode = pl.Buffered(kv_buffers)

    def _q_index(n, hi, li, si):
        return (n, hi, li, 0)

    def _kv_index(n, hi, li, si):
        return (n, hi, si, 0)

    def _bias_index(n, hi, li, si):
        return (n, 0, si)

    kv_block = (1, hg, ts, D)
    if kv_pipeline_mode is not None:
        k_spec = pl.BlockSpec(kv_block, _kv_index, pipeline_mode=kv_pipeline_mode)
        v_spec = pl.BlockSpec(kv_block, _kv_index, pipeline_mode=kv_pipeline_mode)
    else:
        k_spec = pl.BlockSpec(kv_block, _kv_index)
        v_spec = pl.BlockSpec(kv_block, _kv_index)

    grid = (N, H // hg, L // tl, n_kv)

    if vmem_limit_bytes is None:
        vmem_limit_bytes = budget

    return pl.pallas_call(
        _flash_attention_kernel,
        out_shape=jax.ShapeDtypeStruct((N, H, L, D), q.dtype),
        grid_spec=pltpu.PrefetchScalarGridSpec(
            num_scalar_prefetch=0,
            grid=grid,
            in_specs=[
                pl.BlockSpec((1, hg, tl, D), _q_index),
                k_spec,
                v_spec,
                pl.BlockSpec((1, 1, ts), _bias_index),
            ],
            # Output block index ignores the KV axis -> stays resident across it.
            out_specs=pl.BlockSpec((1, hg, tl, D), _q_index),
            scratch_shapes=[
                pltpu.VMEM((hg, tl, D), q.dtype),      # 1/sqrt(D)-scaled q
                pltpu.VMEM((hg, tl, 1), jnp.float32),  # running max
                pltpu.VMEM((hg, tl, 1), jnp.float32),  # running denominator
                pltpu.VMEM((hg, tl, D), jnp.float32),  # running numerator
            ],
        ),
        compiler_params=pltpu.CompilerParams(
            dimension_semantics=("parallel", "parallel", "parallel", "arbitrary"),
            vmem_limit_bytes=vmem_limit_bytes,
        ),
    )(q, k, v, kv_bias)


def full_attention(queries, keys, values, q_mask=None, kv_mask=None, **kw):
    """PyTorch-compatible entry point.

    queries [N,L,H,D], keys/values [N,S,H,D], q_mask [N,L] bool, kv_mask [N,S]
    bool.  Returns [N,L,H,D].

    Note: the query-row mask is intentionally not applied -- a per-query-row
    constant bias cancels in softmax, so fully-masked query rows produce finite
    outputs here instead of PyTorch's NaNs (downstream code is expected to
    ignore/zero them).  Likewise an all-masked key row yields mean(V), not NaN.
    """
    N, L, H, D = queries.shape
    S = keys.shape[1]
    del q_mask  # see docstring

    # Key mask -> tiny additive bias row (N*S floats, no (L,S) mask tensor).
    if kv_mask is None:
        kvb = jnp.zeros((N, 1, S), jnp.float32)
    else:
        kvb = jnp.where(kv_mask, 0.0, _MASK_BIAS).astype(jnp.float32)[:, None, :]

    # NOTE: these transposes only exist to honor the PyTorch [N,L,H,D]
    # interface; keep activations heads-major in the surrounding model and call
    # full_attention_heads_major directly to avoid the extra HBM passes.
    q_nhld = jnp.transpose(queries, (0, 2, 1, 3))
    k_nhsd = jnp.transpose(keys, (0, 2, 1, 3))
    v_nhsd = jnp.transpose(values, (0, 2, 1, 3))

    out_nhld = full_attention_heads_major(q_nhld, k_nhsd, v_nhsd, kvb, **kw)
    return jnp.transpose(out_nhld, (0, 2, 1, 3))


def _reference(q, k, v, q_mask, kv_mask):
    hi = jax.lax.Precision.HIGHEST
    qk = jnp.einsum('nlhd,nshd->nlsh', q, k, precision=hi)
    mask = q_mask[:, :, None, None] & kv_mask[:, None, :, None]
    qk = jnp.where(mask, qk, -jnp.inf)
    temp = 1.0 / q.shape[3] ** 0.5
    a = jax.nn.softmax(temp * qk, axis=2)
    return jnp.einsum('nlsh,nshd->nlhd', a, v, precision=hi)


if __name__ == "__main__":
    N, L, S, H, D = 2, 8, 8, 4, 32
    key = jax.random.PRNGKey(0)
    kq, kk, kv = jax.random.split(key, 3)
    queries = jax.random.normal(kq, (N, L, H, D), dtype=jnp.float32)
    keys = jax.random.normal(kk, (N, S, H, D), dtype=jnp.float32)
    values = jax.random.normal(kv, (N, S, H, D), dtype=jnp.float32)

    # Deterministic masks: every query row keeps >= 1 valid key (matches the
    # module's intended usage; fully-masked rows are NaN in PyTorch anyway).
    q_mask = jnp.ones((N, L), dtype=bool)
    kv_mask = jnp.arange(S)[None, :] < jnp.array([[S], [S - 2]])  # (N, S) bool

    out = full_attention(queries, keys, values, q_mask, kv_mask)
    out = jax.block_until_ready(out)

    ref = _reference(queries, keys, values, q_mask, kv_mask)
    assert out.shape == (N, L, H, D)
    # Tolerance leaves slack for reduced-precision matmul paths on some TPU
    # generations; any logic error (masking / normalization) is >> this.
    assert jnp.allclose(out, ref, atol=2e-2, rtol=2e-2), "mismatch vs reference"
    print("KERNEL_OK")
</pallas_src>

<mosaic_0001>
module attributes {stable_mosaic.version = 11 : i64} {
  func.func @_flash_attention_kernel(%arg0: i32, %arg1: i32, %arg2: i32, %arg3: i32, %arg4: memref<1x4x8x32xf32, #tpu.memory_space<vmem>>, %arg5: memref<1x4x8x32xf32, #tpu.memory_space<vmem>>, %arg6: memref<1x4x8x32xf32, #tpu.memory_space<vmem>>, %arg7: memref<1x1x8xf32, #tpu.memory_space<vmem>>, %arg8: memref<1x4x8x32xf32, #tpu.memory_space<vmem>>, %arg9: memref<4x8x32xf32, #tpu.memory_space<vmem>>, %arg10: memref<4x8x1xf32, #tpu.memory_space<vmem>>, %arg11: memref<4x8x1xf32, #tpu.memory_space<vmem>>, %arg12: memref<4x8x32xf32, #tpu.memory_space<vmem>>) attributes {dimension_semantics = [#tpu.dimension_semantics<parallel>, #tpu.dimension_semantics<parallel>, #tpu.dimension_semantics<parallel>, #tpu.dimension_semantics<arbitrary>], iteration_bounds = array<i64: 2, 1, 1, 1>, scalar_prefetch = 0 : i64, scratch_operands = 4 : i64, tpu.core_type = #tpu.core_type<tc>, window_params = [{transform_indices = @transform_0, window_bounds = array<i64: 1, 4, 8, 32>}, {transform_indices = @transform_1, window_bounds = array<i64: 1, 4, 8, 32>}, {transform_indices = @transform_2, window_bounds = array<i64: 1, 4, 8, 32>}, {transform_indices = @transform_3, window_bounds = array<i64: 1, 1, 8>}, {transform_indices = @transform_4, window_bounds = array<i64: 1, 4, 8, 32>}]} {
    %c0_i32 = arith.constant 0 : i32
    %0 = arith.cmpi eq, %arg3, %c0_i32 : i32
    %1 = arith.extui %0 : i1 to i32
    %c0_i32_0 = arith.constant 0 : i32
    %2 = arith.cmpi ne, %1, %c0_i32_0 : i32
    scf.if %2 {
      %c0_37 = arith.constant 0 : index
      %c0_38 = arith.constant 0 : index
      %c0_39 = arith.constant 0 : index
      %c0_40 = arith.constant 0 : index
      %39 = vector.load %arg4[%c0_37, %c0_38, %c0_39, %c0_40] : memref<1x4x8x32xf32, #tpu.memory_space<vmem>>, vector<1x4x8x32xf32>
      %40 = vector.shape_cast %39 : vector<1x4x8x32xf32> to vector<4x8x32xf32>
      %cst_41 = arith.constant 0.176776692 : f32
      %41 = vector.broadcast %cst_41 : f32 to vector<4x8x32xf32>
      %42 = arith.mulf %40, %41 : vector<4x8x32xf32>
      %c0_42 = arith.constant 0 : index
      %c0_43 = arith.constant 0 : index
      %c0_44 = arith.constant 0 : index
      %43 = vector.load %arg9[%c0_42, %c0_43, %c0_44] : memref<4x8x32xf32, #tpu.memory_space<vmem>>, vector<4x8x32xf32>
      tpu.vector_store %arg9[%c0_42, %c0_43, %c0_44], %42 {strides = array<i32>} : memref<4x8x32xf32, #tpu.memory_space<vmem>>, vector<4x8x32xf32>,
      %cst_45 = arith.constant -1.000000e+30 : f32
      %44 = vector.broadcast %cst_45 : f32 to vector<4x8x1xf32>
      %c0_46 = arith.constant 0 : index
      %c0_47 = arith.constant 0 : index
      %c0_48 = arith.constant 0 : index
      %45 = vector.load %arg10[%c0_46, %c0_47, %c0_48] : memref<4x8x1xf32, #tpu.memory_space<vmem>>, vector<4x8x1xf32>
      tpu.vector_store %arg10[%c0_46, %c0_47, %c0_48], %44 {strides = array<i32>} : memref<4x8x1xf32, #tpu.memory_space<vmem>>, vector<4x8x1xf32>,
      %cst_49 = arith.constant 0.000000e+00 : f32
      %46 = vector.broadcast %cst_49 : f32 to vector<4x8x1xf32>
      %c0_50 = arith.constant 0 : index
      %c0_51 = arith.constant 0 : index
      %c0_52 = arith.constant 0 : index
      %47 = vector.load %arg11[%c0_50, %c0_51, %c0_52] : memref<4x8x1xf32, #tpu.memory_space<vmem>>, vector<4x8x1xf32>
      tpu.vector_store %arg11[%c0_50, %c0_51, %c0_52], %46 {strides = array<i32>} : memref<4x8x1xf32, #tpu.memory_space<vmem>>, vector<4x8x1xf32>,
      %cst_53 = arith.constant 0.000000e+00 : f32
      %48 = vector.broadcast %cst_53 : f32 to vector<4x8x32xf32>
      %c0_54 = arith.constant 0 : index
      %c0_55 = arith.constant 0 : index
      %c0_56 = arith.constant 0 : index
      %49 = vector.load %arg12[%c0_54, %c0_55, %c0_56] : memref<4x8x32xf32, #tpu.memory_space<vmem>>, vector<4x8x32xf32>
      tpu.vector_store %arg12[%c0_54, %c0_55, %c0_56], %48 {strides = array<i32>} : memref<4x8x32xf32, #tpu.memory_space<vmem>>, vector<4x8x32xf32>,
    } else {
    }
    %c0 = arith.constant 0 : index
    %c0_1 = arith.constant 0 : index
    %c0_2 = arith.constant 0 : index
    %3 = vector.load %arg9[%c0, %c0_1, %c0_2] : memref<4x8x32xf32, #tpu.memory_space<vmem>>, vector<4x8x32xf32>
    %c0_3 = arith.constant 0 : index
    %c0_4 = arith.constant 0 : index
    %c0_5 = arith.constant 0 : index
    %c0_6 = arith.constant 0 : index
    %4 = vector.load %arg5[%c0_3, %c0_4, %c0_5, %c0_6] : memref<1x4x8x32xf32, #tpu.memory_space<vmem>>, vector<1x4x8x32xf32>
    %5 = vector.shape_cast %4 : vector<1x4x8x32xf32> to vector<4x8x32xf32>
    "tpu.trace_start"() <{level = 10 : i32, message = "hld,hsd->hls"}> : () -> ()
    %cst = arith.constant dense<0.000000e+00> : vector<4x8x8xf32>
    %6 = tpu.matmul %3, %5, %cst {dimension_numbers = #tpu.dot_dimension_numbers<[2], [2], [1], [1], [0, 0, 0, 1, 1, 1], [0], [0]>} : vector<4x8x32xf32>, vector<4x8x32xf32>, vector<4x8x8xf32> -> vector<4x8x8xf32>
    "tpu.trace_stop"() : () -> ()
    %c0_7 = arith.constant 0 : index
    %c0_8 = arith.constant 0 : index
    %c0_9 = arith.constant 0 : index
    %7 = vector.load %arg7[%c0_7, %c0_8, %c0_9] : memref<1x1x8xf32, #tpu.memory_space<vmem>>, vector<1x1x8xf32>
    %8 = vector.shape_cast %7 : vector<1x1x8xf32> to vector<1x8xf32>
    %9 = vector.shape_cast %8 : vector<1x8xf32> to vector<1x1x8xf32>
    %10 = vector.broadcast %9 : vector<1x1x8xf32> to vector<4x8x8xf32>
    %11 = arith.addf %6, %10 : vector<4x8x8xf32>
    %c0_10 = arith.constant 0 : index
    %c0_11 = arith.constant 0 : index
    %c0_12 = arith.constant 0 : index
    %12 = vector.load %arg10[%c0_10, %c0_11, %c0_12] : memref<4x8x1xf32, #tpu.memory_space<vmem>>, vector<4x8x1xf32>
    %cst_13 = arith.constant dense<0xFF800000> : vector<4x8xf32>
    %13 = vector.multi_reduction <maximumf>, %11, %cst_13 [2] : vector<4x8x8xf32> to vector<4x8xf32>
    %14 = vector.shape_cast %13 : vector<4x8xf32> to vector<4x8x1xf32>
    %15 = arith.maximumf %12, %14 : vector<4x8x1xf32>
    %16 = arith.subf %12, %15 : vector<4x8x1xf32>
    %17 = math.exp %16 : vector<4x8x1xf32>
    %18 = vector.broadcast %15 : vector<4x8x1xf32> to vector<4x8x8xf32>
    %19 = arith.subf %11, %18 : vector<4x8x8xf32>
    %20 = math.exp %19 : vector<4x8x8xf32>
    %cst_14 = arith.constant dense<0.000000e+00> : vector<4x8xf32>
    %21 = vector.multi_reduction <add>, %20, %cst_14 [2] : vector<4x8x8xf32> to vector<4x8xf32>
    %22 = vector.shape_cast %21 : vector<4x8xf32> to vector<4x8x1xf32>
    %c0_15 = arith.constant 0 : index
    %c0_16 = arith.constant 0 : index
    %c0_17 = arith.constant 0 : index
    %23 = vector.load %arg11[%c0_15, %c0_16, %c0_17] : memref<4x8x1xf32, #tpu.memory_space<vmem>>, vector<4x8x1xf32>
    %24 = arith.mulf %17, %23 : vector<4x8x1xf32>
    %25 = arith.addf %24, %22 : vector<4x8x1xf32>
    %c0_18 = arith.constant 0 : index
    %c0_19 = arith.constant 0 : index
    %c0_20 = arith.constant 0 : index
    %26 = vector.load %arg11[%c0_18, %c0_19, %c0_20] : memref<4x8x1xf32, #tpu.memory_space<vmem>>, vector<4x8x1xf32>
    tpu.vector_store %arg11[%c0_18, %c0_19, %c0_20], %25 {strides = array<i32>} : memref<4x8x1xf32, #tpu.memory_space<vmem>>, vector<4x8x1xf32>,
    %c0_21 = arith.constant 0 : index
    %c0_22 = arith.constant 0 : index
    %c0_23 = arith.constant 0 : index
    %27 = vector.load %arg12[%c0_21, %c0_22, %c0_23] : memref<4x8x32xf32, #tpu.memory_space<vmem>>, vector<4x8x32xf32>
    %28 = vector.broadcast %17 : vector<4x8x1xf32> to vector<4x8x32xf32>
    %29 = arith.mulf %28, %27 : vector<4x8x32xf32>
    %c0_24 = arith.constant 0 : index
    %c0_25 = arith.constant 0 : index
    %c0_26 = arith.constant 0 : index
    %c0_27 = arith.constant 0 : index
    %30 = vector.load %arg6[%c0_24, %c0_25, %c0_26, %c0_27] : memref<1x4x8x32xf32, #tpu.memory_space<vmem>>, vector<1x4x8x32xf32>
    %31 = vector.shape_cast %30 : vector<1x4x8x32xf32> to vector<4x8x32xf32>
    "tpu.trace_start"() <{level = 10 : i32, message = "hls,hsd->hld"}> : () -> ()
    %cst_28 = arith.constant dense<0.000000e+00> : vector<4x8x32xf32>
    %32 = tpu.matmul %20, %31, %cst_28 {dimension_numbers = #tpu.dot_dimension_numbers<[2], [1], [1], [2], [0, 0, 0, 1, 1, 2], [0], [0]>} : vector<4x8x8xf32>, vector<4x8x32xf32>, vector<4x8x32xf32> -> vector<4x8x32xf32>
    "tpu.trace_stop"() : () -> ()
    %33 = arith.addf %29, %32 : vector<4x8x32xf32>
    %c0_29 = arith.constant 0 : index
    %c0_30 = arith.constant 0 : index
    %c0_31 = arith.constant 0 : index
    %34 = vector.load %arg12[%c0_29, %c0_30, %c0_31] : memref<4x8x32xf32, #tpu.memory_space<vmem>>, vector<4x8x32xf32>
    tpu.vector_store %arg12[%c0_29, %c0_30, %c0_31], %33 {strides = array<i32>} : memref<4x8x32xf32, #tpu.memory_space<vmem>>, vector<4x8x32xf32>,
    %c0_32 = arith.constant 0 : index
    %c0_33 = arith.constant 0 : index
    %c0_34 = arith.constant 0 : index
    %35 = vector.load %arg10[%c0_32, %c0_33, %c0_34] : memref<4x8x1xf32, #tpu.memory_space<vmem>>, vector<4x8x1xf32>
    tpu.vector_store %arg10[%c0_32, %c0_33, %c0_34], %15 {strides = array<i32>} : memref<4x8x1xf32, #tpu.memory_space<vmem>>, vector<4x8x1xf32>,
    %c0_i32_35 = arith.constant 0 : i32
    %36 = arith.cmpi eq, %arg3, %c0_i32_35 : i32
    %37 = arith.extui %36 : i1 to i32
    %c0_i32_36 = arith.constant 0 : i32
    %38 = arith.cmpi ne, %37, %c0_i32_36 : i32
    scf.if %38 {
      %c0_37 = arith.constant 0 : index
      %c0_38 = arith.constant 0 : index
      %c0_39 = arith.constant 0 : index
      %39 = vector.load %arg11[%c0_37, %c0_38, %c0_39] : memref<4x8x1xf32, #tpu.memory_space<vmem>>, vector<4x8x1xf32>
      %40 = tpu.reciprocal %39 {approx = true} : vector<4x8x1xf32> -> vector<4x8x1xf32>
      %41 = arith.mulf %39, %40 : vector<4x8x1xf32>
      %cst_40 = arith.constant 2.000000e+00 : f32
      %42 = vector.broadcast %cst_40 : f32 to vector<4x8x1xf32>
      %43 = arith.subf %42, %41 : vector<4x8x1xf32>
      %44 = arith.mulf %40, %43 : vector<4x8x1xf32>
      %c0_41 = arith.constant 0 : index
      %c0_42 = arith.constant 0 : index
      %c0_43 = arith.constant 0 : index
      %45 = vector.load %arg12[%c0_41, %c0_42, %c0_43] : memref<4x8x32xf32, #tpu.memory_space<vmem>>, vector<4x8x32xf32>
      %46 = vector.broadcast %44 : vector<4x8x1xf32> to vector<4x8x32xf32>
      %47 = arith.mulf %45, %46 : vector<4x8x32xf32>
      %c0_44 = arith.constant 0 : index
      %c0_45 = arith.constant 0 : index
      %c0_46 = arith.constant 0 : index
      %c0_47 = arith.constant 0 : index
      %48 = vector.load %arg8[%c0_44, %c0_45, %c0_46, %c0_47] : memref<1x4x8x32xf32, #tpu.memory_space<vmem>>, vector<1x4x8x32xf32>
      %49 = vector.shape_cast %48 : vector<1x4x8x32xf32> to vector<4x8x32xf32>
      %50 = vector.shape_cast %47 : vector<4x8x32xf32> to vector<1x4x8x32xf32>
      tpu.vector_store %arg8[%c0_44, %c0_45, %c0_46, %c0_47], %50 {strides = array<i32>} : memref<1x4x8x32xf32, #tpu.memory_space<vmem>>, vector<1x4x8x32xf32>,
    } else {
    }
    return
  }
  func.func @transform_0(%arg0: i32, %arg1: i32, %arg2: i32, %arg3: i32) -> (i32, i32, i32, i32) {
    %c0_i32 = arith.constant 0 : i32
    %c0_i32_0 = arith.constant 0 : i32
    return %arg0, %arg1, %arg2, %c0_i32 : i32, i32, i32, i32
  }
  func.func @transform_1(%arg0: i32, %arg1: i32, %arg2: i32, %arg3: i32) -> (i32, i32, i32, i32) {
    %c0_i32 = arith.constant 0 : i32
    %c0_i32_0 = arith.constant 0 : i32
    return %arg0, %arg1, %arg3, %c0_i32 : i32, i32, i32, i32
  }
  func.func @transform_2(%arg0: i32, %arg1: i32, %arg2: i32, %arg3: i32) -> (i32, i32, i32, i32) {
    %c0_i32 = arith.constant 0 : i32
    %c0_i32_0 = arith.constant 0 : i32
    return %arg0, %arg1, %arg3, %c0_i32 : i32, i32, i32, i32
  }
  func.func @transform_3(%arg0: i32, %arg1: i32, %arg2: i32, %arg3: i32) -> (i32, i32, i32) {
    %c0_i32 = arith.constant 0 : i32
    %c0_i32_0 = arith.constant 0 : i32
    return %arg0, %c0_i32, %arg3 : i32, i32, i32
  }
  func.func @transform_4(%arg0: i32, %arg1: i32, %arg2: i32, %arg3: i32) -> (i32, i32, i32, i32) {
    %c0_i32 = arith.constant 0 : i32
    %c0_i32_0 = arith.constant 0 : i32
    return %arg0, %arg1, %arg2, %c0_i32 : i32, i32, i32, i32
  }
}

</mosaic_0001>

<llo_original>
// kernel: tpu_custom_call.1
$region0: #{tpu_custom_call.1}
  #allocation0 [shape = 'u32[]', space=smem, size = 0x4, offset = 0x4, fixed_abs, tag = 'smem constant byte address 0x4 - core index']
  #allocation1 [shape = 'u32[144,128]{1,0:T(1,128)}', space=vmem, size = 0x12000, scoped, tag = 'internal scratch']
  #allocation2 [shape = 'f32[4,8,32]{2,1,0:T(8,128)}', space=vmem, size = 0x4000, scoped, tag = 'scratch operand']
  #allocation3 [shape = 'f32[4,8,1]{2,1,0:T(8,128)}', space=vmem, size = 0x4000, scoped, tag = 'scratch operand']
  #allocation4 [shape = 'f32[4,8,1]{2,1,0:T(8,128)}', space=vmem, size = 0x4000, scoped, tag = 'scratch operand']
  #allocation5 [shape = 'f32[4,8,32]{2,1,0:T(8,128)}', space=vmem, size = 0x4000, scoped, tag = 'scratch operand']
  %s0 = inlined_call_operand.hbm [shape: f32[2,4,8,32], index: 0, kind: input, shape index: {}]
  %s1 = inlined_call_operand.hbm [shape: f32[2,4,8,32], index: 1, kind: input, shape index: {}]
  %s2 = inlined_call_operand.hbm [shape: f32[2,4,8,32], index: 2, kind: input, shape index: {}]
  %s3 = inlined_call_operand.vmem [shape: f32[2,1,8], index: 3, kind: input, shape index: {}]
  %s4 = inlined_call_operand.hbm [shape: f32[2,4,8,32], index: 4, kind: output, shape index: {}]
  %s5 = sld [smem:[#allocation0]]
  $region69: #{tpu_custom_call.1} parent=0
    _
  %s7 = ssub.s32 1, %s5
  %s8 = scalar_select 0, %s7, %s5
  $region1: #{tpu_custom_call.1} parent=0
    #allocation6 [shape = 'u8[32768]{0}', space=vmem, size = 0x8000, scoped, tag = 'input window, operand 0']
    #allocation7 [shape = 's32[2]{0}', space=sflag, size = 0x8, scoped, tag = 'scoped memory for tpu_custom_call.1']
    #allocation8 [shape = 's32[2]{0}', space=sflag, size = 0x8, scoped, tag = 'scoped memory for tpu_custom_call.1']
    #allocation9 [shape = 'u8[32768]{0}', space=vmem, size = 0x8000, scoped, tag = 'input window, operand 1']
    #allocation10 [shape = 's32[2]{0}', space=sflag, size = 0x8, scoped, tag = 'scoped memory for tpu_custom_call.1']
    #allocation11 [shape = 'u8[32768]{0}', space=vmem, size = 0x8000, scoped, tag = 'input window, operand 2']
    #allocation12 [shape = 'u8[32768]{0}', space=vmem, size = 0x8000, scoped, tag = 'output window, operand 0']
    %9 = vsyncpa [#allocation7], 0
    %s10 = scalar_lea.sflag [#allocation7], 1
    %11 = vsyncpa %s10, 0
    %12 = vsyncpa [#allocation10], 0
    %s13 = scalar_lea.sflag [#allocation10], 1
    %14 = vsyncpa %s13, 0
    %15 = vsyncpa [#allocation8], 0
    %s16 = scalar_lea.sflag [#allocation8], 1
    %17 = vsyncpa %s16, 0
    loop: start=0, step=1, limit=4
    $region2: #{tpu_custom_call.1} parent=1 // loop_pre_header
      _
    $region3: #{tpu_custom_call.1} parent=1 // loop_header
      %s19 = sphi 0, %s23
      %p20 = scmp.ge.s32.totalorder %s19, 4
      %s26 = sphi 0, %s52
      %s27 = sphi 0, %s48
      %s28 = sphi 0, %s44
      %s29 = sphi 0, %s40
      %s30 = sphi 0, %s26
      %s31 = sphi 0, %s27
      %s32 = sphi 0, %s28
      %s33 = sphi 0, %s29
      %s34 = sphi 0, %s30
      %s35 = sphi 0, %s31
      %s36 = sphi 0, %s32
      %s37 = sphi 0, %s33
      %s59 = sphi 0, %s61
      %s62 = sphi 0, %s59
      %s63 = sphi 0, %s62
      %s79 = sphi 0, %s63
      %s89 = sphi 0, %s91
      %s92 = sphi 0, %s89
      %s93 = sphi 0, %s92
      %s109 = sphi 0, %s93
      %s119 = sphi 0, %s121
      %s122 = sphi 0, %s119
      %s123 = sphi 0, %s122
      %s139 = sphi 0, %s123
      %s147 = sphi 0, %s149
      %s150 = sphi 0, %s147
      %s151 = sphi 0, %s150
      %s167 = sphi 0, %s151
      %s177 = sphi 0, %s179
      %s180 = sphi 0, %s177
      %s181 = sphi 0, %s180
      %s197 = sphi 0, %s181
    $region4: #{tpu_custom_call.1} parent=1 // loop_header_branch
      %22 = sbr.rel (%p20) target = $region8
    $region5: #{tpu_custom_call.1} parent=1 // loop_body
      %s24 = ssub.s32 %s19, 1
      %s25 = ssub.s32 %s19, 2
      %s38 = sadd.s32 1, %s29
      %p39 = scmp.ge.s32.totalorder %s38, 1
      %s40 = scalar_select %p39, 0, %s38
      %s41 = sadd.s32 1, %s28
      %s42 = scalar_select %p39, %s41, %s28
      %p43 = scmp.ge.s32.totalorder %s42, 1
      %s44 = scalar_select %p43, 0, %s42
      %s45 = sadd.s32 1, %s27
      %s46 = scalar_select %p43, %s45, %s27
      %p47 = scmp.ge.s32.totalorder %s46, 1
      %s48 = scalar_select %p47, 0, %s46
      %s49 = sadd.s32 1, %s26
      %s50 = scalar_select %p47, %s49, %s26
      %p51 = scmp.ge.s32.totalorder %s50, 2
      %s52 = scalar_select %p51, 0, %s50
      %s53 = ssub.s32 %s26, %s52
      %s54 = ssub.s32 %s27, %s48
      %s55 = sor.u32 %s53, %s54
      %s56 = ssub.s32 %s28, %s44
      %s57 = sor.u32 %s55, %s56
      %p58 = scmp.eq.s32.totalorder %s57, 0
      %s60 = sadd.s32 %s59, 1
      %s61 = scalar_select %p58, %s59, %s60
      %p64 = pneg %p58
      %p65 = scmp.eq.s32.totalorder %s19, 1
      %p66 = por %p64, %p65
      %p67 = scmp.ne.s32.totalorder %s59, %s62
      %p68 = scmp.eq.s32.totalorder %s19, 0
      %p69 = por %p67, %p68
      %p70 = scmp.ne.s32.totalorder %s59, %s62
      %p71 = scmp.eq.s32.totalorder %s24, 1
      %p72 = por %p70, %p71
      %p73 = scmp.ne.s32.totalorder %s62, %s63
      %p74 = scmp.eq.s32.totalorder %s24, 0
      %p75 = por %p73, %p74
      %p76 = scmp.ne.s32.totalorder %s62, %s63
      %p77 = scmp.eq.s32.totalorder %s25, 1
      %p78 = por %p76, %p77
      %p80 = scmp.ne.s32.totalorder %s63, %s79
      %p81 = scmp.eq.s32.totalorder %s25, 0
      %p82 = por %p80, %p81
      %s83 = ssub.s32 %s26, %s52
      %s84 = ssub.s32 %s27, %s48
      %s85 = sor.u32 %s83, %s84
      %s86 = ssub.s32 %s29, %s40
      %s87 = sor.u32 %s85, %s86
      %p88 = scmp.eq.s32.totalorder %s87, 0
      %s90 = sadd.s32 %s89, 1
      %s91 = scalar_select %p88, %s89, %s90
      %p94 = pneg %p88
      %p95 = scmp.eq.s32.totalorder %s19, 1
      %p96 = por %p94, %p95
      %p97 = scmp.ne.s32.totalorder %s89, %s92
      %p98 = scmp.eq.s32.totalorder %s19, 0
      %p99 = por %p97, %p98
      %p100 = scmp.ne.s32.totalorder %s89, %s92
      %p101 = scmp.eq.s32.totalorder %s24, 1
      %p102 = por %p100, %p101
      %p103 = scmp.ne.s32.totalorder %s92, %s93
      %p104 = scmp.eq.s32.totalorder %s24, 0
      %p105 = por %p103, %p104
      %p106 = scmp.ne.s32.totalorder %s92, %s93
      %p107 = scmp.eq.s32.totalorder %s25, 1
      %p108 = por %p106, %p107
      %p110 = scmp.ne.s32.totalorder %s93, %s109
      %p111 = scmp.eq.s32.totalorder %s25, 0
      %p112 = por %p110, %p111
      %s113 = ssub.s32 %s26, %s52
      %s114 = ssub.s32 %s27, %s48
      %s115 = sor.u32 %s113, %s114
      %s116 = ssub.s32 %s29, %s40
      %s117 = sor.u32 %s115, %s116
      %p118 = scmp.eq.s32.totalorder %s117, 0
      %s120 = sadd.s32 %s119, 1
      %s121 = scalar_select %p118, %s119, %s120
      %p124 = pneg %p118
      %p125 = scmp.eq.s32.totalorder %s19, 1
      %p126 = por %p124, %p125
      %p127 = scmp.ne.s32.totalorder %s119, %s122
      %p128 = scmp.eq.s32.totalorder %s19, 0
      %p129 = por %p127, %p128
      %p130 = scmp.ne.s32.totalorder %s119, %s122
      %p131 = scmp.eq.s32.totalorder %s24, 1
      %p132 = por %p130, %p131
      %p133 = scmp.ne.s32.totalorder %s122, %s123
      %p134 = scmp.eq.s32.totalorder %s24, 0
      %p135 = por %p133, %p134
      %p136 = scmp.ne.s32.totalorder %s122, %s123
      %p137 = scmp.eq.s32.totalorder %s25, 1
      %p138 = por %p136, %p137
      %p140 = scmp.ne.s32.totalorder %s123, %s139
      %p141 = scmp.eq.s32.totalorder %s25, 0
      %p142 = por %p140, %p141
      %s143 = ssub.s32 %s26, %s52
      %s144 = ssub.s32 %s29, %s40
      %s145 = sor.u32 %s143, %s144
      %p146 = scmp.eq.s32.totalorder %s145, 0
      %s148 = sadd.s32 %s147, 1
      %s149 = scalar_select %p146, %s147, %s148
      %p152 = pneg %p146
      %p153 = scmp.eq.s32.totalorder %s19, 1
      %p154 = por %p152, %p153
      %p155 = scmp.ne.s32.totalorder %s147, %s150
      %p156 = scmp.eq.s32.totalorder %s19, 0
      %p157 = por %p155, %p156
      %p158 = scmp.ne.s32.totalorder %s147, %s150
      %p159 = scmp.eq.s32.totalorder %s24, 1
      %p160 = por %p158, %p159
      %p161 = scmp.ne.s32.totalorder %s150, %s151
      %p162 = scmp.eq.s32.totalorder %s24, 0
      %p163 = por %p161, %p162
      %p164 = scmp.ne.s32.totalorder %s150, %s151
      %p165 = scmp.eq.s32.totalorder %s25, 1
      %p166 = por %p164, %p165
      %p168 = scmp.ne.s32.totalorder %s151, %s167
      %p169 = scmp.eq.s32.totalorder %s25, 0
      %p170 = por %p168, %p169
      %s171 = ssub.s32 %s26, %s52
      %s172 = ssub.s32 %s27, %s48
      %s173 = sor.u32 %s171, %s172
      %s174 = ssub.s32 %s28, %s44
      %s175 = sor.u32 %s173, %s174
      %p176 = scmp.eq.s32.totalorder %s175, 0
      %s178 = sadd.s32 %s177, 1
      %s179 = scalar_select %p176, %s177, %s178
      %p182 = pneg %p176
      %p183 = scmp.eq.s32.totalorder %s19, 1
      %p184 = por %p182, %p183
      %p185 = scmp.ne.s32.totalorder %s177, %s180
      %p186 = scmp.eq.s32.totalorder %s19, 0
      %p187 = por %p185, %p186
      %p188 = scmp.ne.s32.totalorder %s177, %s180
      %p189 = scmp.eq.s32.totalorder %s24, 1
      %p190 = por %p188, %p189
      %p191 = scmp.ne.s32.totalorder %s180, %s181
      %p192 = scmp.eq.s32.totalorder %s24, 0
      %p193 = por %p191, %p192
      %p194 = scmp.ne.s32.totalorder %s180, %s181
      %p195 = scmp.eq.s32.totalorder %s25, 1
      %p196 = por %p194, %p195
      %p198 = scmp.ne.s32.totalorder %s181, %s197
      %p199 = scmp.eq.s32.totalorder %s25, 0
      %p200 = por %p198, %p199
      %p201 = scmp.le.s32.totalorder 1, %s19
      %p202 = scmp.lt.s32.totalorder %s19, 3
      %p203 = pnand %p201, %p202
      %p204 = pneg %p203
      // Predicated region
      $region9: #{tpu_custom_call.1} parent=5 // pred_check
        _
      $region10: #{tpu_custom_call.1} parent=5 // pred_check_branch
        %206 = sbr.rel (%p203) target = $region12
      $region11: #{tpu_custom_call.1} parent=5 // pred_region
        %s207 = ssub.s32 %s19, 1
      $region12: #{tpu_custom_call.1} parent=5 // pred_fallthru
        _
      %p208 = scmp.lt.s32.totalorder %s19, 2
      // Predicated region
      $region13: #{tpu_custom_call.1} parent=5 // pred_check
        %p209 = pneg %p208
      $region14: #{tpu_custom_call.1} parent=5 // pred_check_branch
        %211 = sbr.rel (%p209) target = $region16
      $region15: #{tpu_custom_call.1} parent=5 // pred_region
        // Predicated region
        $region17: #{tpu_custom_call.1} parent=15 // pred_check
          %p212 = pneg %p69
        $region18: #{tpu_custom_call.1} parent=15 // pred_check_branch
          %214 = sbr.rel (%p212) target = $region20
        $region19: #{tpu_custom_call.1} parent=15 // pred_region
          %s215 = sand.u32 %s59, 1
          %s216 = scalar_lea.sflag [#allocation7], %s215
          %s217 = sand.u32 %s59, 1
          %s218 = smul.addr %s217, 32
          %s219 = scalar_lea.vmem [#allocation6], %s218
          %s220 = smul.u32 4, %s27
          %s222 = ssub.s32 512, 512
          %223 = vsyncadd %s216, %s222
          %s224 = sadd.s32 %s28, %s220
          %s225 = smul.addr %s26, 4
          %s226 = sadd.s32 %s224, %s225
          %s227 = smul.addr %s226, 128
          %s228 = scalar_lea.hbm %s0, %s227
          %s229 = sshll.u32 %s219, 4
          %s230 = int_to_ptr.vmem [resolvable:$true] %s229
          %235 = dma.hbm_to_vmem [thread:$0]  %s228, 512, %s230, %s216, 128, 128, 8
        $region20: #{tpu_custom_call.1} parent=15 // pred_fallthru
          _
        // Predicated region
        $region21: #{tpu_custom_call.1} parent=15 // pred_check
          %p236 = pneg %p99
        $region22: #{tpu_custom_call.1} parent=15 // pred_check_branch
          %238 = sbr.rel (%p236) target = $region24
        $region23: #{tpu_custom_call.1} parent=15 // pred_region
          %s239 = sand.u32 %s19, 1
          %s240 = scalar_lea.sflag [#allocation10], %s239
          %s241 = sand.u32 %s89, 1
          %s242 = smul.addr %s241, 32
          %s243 = scalar_lea.vmem [#allocation9], %s242
          %s244 = smul.u32 4, %s27
          %s246 = ssub.s32 512, 512
          %247 = vsyncadd %s240, %s246
          %s248 = sadd.s32 %s29, %s244
          %s249 = smul.addr %s26, 4
          %s250 = sadd.s32 %s248, %s249
          %s251 = smul.addr %s250, 128
          %s252 = scalar_lea.hbm %s1, %s251
          %s253 = sshll.u32 %s243, 4
          %s254 = int_to_ptr.vmem [resolvable:$true] %s253
          %259 = dma.hbm_to_vmem [thread:$0]  %s252, 512, %s254, %s240, 128, 128, 8
        $region24: #{tpu_custom_call.1} parent=15 // pred_fallthru
          _
        // Predicated region
        $region25: #{tpu_custom_call.1} parent=15 // pred_check
          %p260 = pneg %p129
        $region26: #{tpu_custom_call.1} parent=15 // pred_check_branch
          %262 = sbr.rel (%p260) target = $region28
        $region27: #{tpu_custom_call.1} parent=15 // pred_region
          %s263 = sand.u32 %s19, 1
          %s264 = scalar_lea.sflag [#allocation10], %s263
          %s265 = sand.u32 %s119, 1
          %s266 = smul.addr %s265, 32
          %s267 = scalar_lea.vmem [#allocation11], %s266
          %s268 = smul.u32 4, %s27
          %s270 = ssub.s32 512, 512
          %271 = vsyncadd %s264, %s270
          %s272 = sadd.s32 %s29, %s268
          %s273 = smul.addr %s26, 4
          %s274 = sadd.s32 %s272, %s273
          %s275 = smul.addr %s274, 128
          %s276 = scalar_lea.hbm %s2, %s275
          %s277 = sshll.u32 %s267, 4
          %s278 = int_to_ptr.vmem [resolvable:$true] %s277
          %283 = dma.hbm_to_vmem [thread:$0]  %s276, 512, %s278, %s264, 128, 128, 8
        $region28: #{tpu_custom_call.1} parent=15 // pred_fallthru
          _
        // Predicated region
        $region29: #{tpu_custom_call.1} parent=15 // pred_check
          %p284 = pneg %p157
        $region30: #{tpu_custom_call.1} parent=15 // pred_check_branch
          %286 = sbr.rel (%p284) target = $region32
        $region31: #{tpu_custom_call.1} parent=15 // pred_region
          %p287 = scmp.lt.s32.totalorder %s26, 1
          %s288 = scalar_select %p287, %s26, 1
          %p289 = scmp.lt.s32.totalorder %s29, 0
          %s290 = scalar_select %p289, %s29, 0
          %s291 = sadd.s32 %s290, %s288
          %s292 = scalar_lea.vmem %s3, %s291
        $region32: #{tpu_custom_call.1} parent=15 // pred_fallthru
          _
      $region16: #{tpu_custom_call.1} parent=5 // pred_fallthru
        _
      %p293 = scmp.le.s32.totalorder 1, %s19
      %p294 = scmp.lt.s32.totalorder %s19, 3
      %p295 = pnand %p293, %p294
      %p296 = pneg %p295
      // Predicated region
      $region33: #{tpu_custom_call.1} parent=5 // pred_check
        _
      $region34: #{tpu_custom_call.1} parent=5 // pred_check_branch
        %298 = sbr.rel (%p295) target = $region36
      $region35: #{tpu_custom_call.1} parent=5 // pred_region
        %s299 = ssub.s32 %s19, 1
        %s300 = sand.u32 %s62, 1
        %s301 = scalar_lea.sflag [#allocation7], %s300
        %s302 = sand.u32 %s62, 1
        %s303 = smul.addr %s302, 32
        %s304 = scalar_lea.vmem [#allocation6], %s303
        // Predicated region
        $region37: #{tpu_custom_call.1} parent=35 // pred_check
          %p305 = pneg %p75
        $region38: #{tpu_custom_call.1} parent=35 // pred_check_branch
          %307 = sbr.rel (%p305) target = $region40
        $region39: #{tpu_custom_call.1} parent=35 // pred_region
          %308 = dma.done %s301, 512
        $region40: #{tpu_custom_call.1} parent=35 // pred_fallthru
          _
        %s309 = sand.u32 %s24, 1
        %s310 = scalar_lea.sflag [#allocation10], %s309
        %s311 = sand.u32 %s92, 1
        %s312 = smul.addr %s311, 32
        %s313 = scalar_lea.vmem [#allocation9], %s312
        // Predicated region
        $region41: #{tpu_custom_call.1} parent=35 // pred_check
          %p314 = pneg %p105
        $region42: #{tpu_custom_call.1} parent=35 // pred_check_branch
          %316 = sbr.rel (%p314) target = $region44
        $region43: #{tpu_custom_call.1} parent=35 // pred_region
          %317 = dma.done %s310, 512
        $region44: #{tpu_custom_call.1} parent=35 // pred_fallthru
          _
        %s318 = sand.u32 %s24, 1
        %s319 = scalar_lea.sflag [#allocation10], %s318
        %s320 = sand.u32 %s122, 1
        %s321 = smul.addr %s320, 32
        %s322 = scalar_lea.vmem [#allocation11], %s321
        // Predicated region
        $region45: #{tpu_custom_call.1} parent=35 // pred_check
          %p323 = pneg %p135
        $region46: #{tpu_custom_call.1} parent=35 // pred_check_branch
          %325 = sbr.rel (%p323) target = $region48
        $region47: #{tpu_custom_call.1} parent=35 // pred_region
          %326 = dma.done %s319, 512
        $region48: #{tpu_custom_call.1} parent=35 // pred_fallthru
          _
        %s327 = sand.u32 %s62, 1
        %s328 = scalar_lea.sflag [#allocation7], %s327
        %s329 = sand.u32 %s62, 1
        %s330 = smul.addr %s329, 32
        %s331 = scalar_lea.vmem [#allocation6], %s330
        %p332 = pneg %p75
        %p333 = pneg %p72
        %s334 = sand.u32 %s24, 1
        %s335 = scalar_lea.sflag [#allocation10], %s334
        %s336 = sand.u32 %s92, 1
        %s337 = smul.addr %s336, 32
        %s338 = scalar_lea.vmem [#allocation9], %s337
        %p339 = pneg %p105
        %p340 = pneg %p102
        %s341 = sand.u32 %s24, 1
        %s342 = scalar_lea.sflag [#allocation10], %s341
        %s343 = sand.u32 %s122, 1
        %s344 = smul.addr %s343, 32
        %s345 = scalar_lea.vmem [#allocation11], %s344
        %p346 = pneg %p135
        %p347 = pneg %p132
        %p348 = scmp.lt.s32.totalorder %s30, 1
        %s349 = scalar_select %p348, %s30, 1
        %p350 = scmp.lt.s32.totalorder %s33, 0
        %s351 = scalar_select %p350, %s33, 0
        %s352 = sadd.s32 %s351, %s349
        %s353 = scalar_lea.vmem %s3, %s352
        %p354 = pneg %p163
        %p355 = pneg %p160
        %p356 = pneg %p193
        %p357 = pneg %p190
        %s358 = sand.u32 %s180, 1
        %s359 = scalar_lea.sflag [#allocation8], %s358
        %s360 = sand.u32 %s180, 1
        %s361 = smul.addr %s360, 32
        %s362 = scalar_lea.vmem [#allocation12], %s361
        %s363 = smul.u32 4, %s31
        %s364 = smul.u32 4, %s31
        %s365 = smul.u32 4, %s31
        %p366 = scmp.lt.s32.totalorder %s30, 1
        %s367 = scalar_select %p366, %s30, 1
        %p368 = scmp.lt.s32.totalorder %s33, 0
        %s369 = scalar_select %p368, %s33, 0
        %s370 = sadd.s32 %s369, %s367
        %s371 = scalar_lea.vmem %s3, %s370
        %s372 = smul.u32 4, %s31
        %p373 = scmp.eq.s32.totalorder %s33, 0
        // Predicated region
        $region49: #{tpu_custom_call.1} parent=35 // pred_check
          %p374 = pneg %p373
        $region50: #{tpu_custom_call.1} parent=35 // pred_check_branch
          %376 = sbr.rel (%p374) target = $region52
        $region51: #{tpu_custom_call.1} parent=35 // pred_region
          %v377 = vld [vmem:[%s304] sm:$0xff]
          %v378 = vld [vmem:[%s304 + $0x8] sm:$0xff]
          %v379 = vld [vmem:[%s304 + $0x10] sm:$0xff]
          %v380 = vld [vmem:[%s304 + $0x18] sm:$0xff]
          %v381 = vmul.f32 %v377, 0.17677669
          %v382 = vmul.f32 %v378, 0.17677669
          %v383 = vmul.f32 %v379, 0.17677669
          %v384 = vmul.f32 %v380, 0.17677669
          %vm385 = vcmask 261120
          %386 = vst.msk [vmem:[#allocation2] sm:$0xff] %vm385, %v381
          %387 = vst.msk [vmem:[#allocation2 + $0x8] sm:$0xff] %vm385, %v382
          %388 = vst.msk [vmem:[#allocation2 + $0x10] sm:$0xff] %vm385, %v383
          %389 = vst.msk [vmem:[#allocation2 + $0x18] sm:$0xff] %vm385, %v384
          %vm390 = vcmask 7168
          %391 = vst.msk [vmem:[#allocation3] sm:$0xff] %vm390, -1e+30
          %392 = vst.msk [vmem:[#allocation3 + $0x8] sm:$0xff] %vm390, -1e+30
          %393 = vst.msk [vmem:[#allocation3 + $0x10] sm:$0xff] %vm390, -1e+30
          %394 = vst.msk [vmem:[#allocation3 + $0x18] sm:$0xff] %vm390, -1e+30
          %395 = vst.msk [vmem:[#allocation4] sm:$0xff] %vm390, 0.0
          %396 = vst.msk [vmem:[#allocation4 + $0x8] sm:$0xff] %vm390, 0.0
          %397 = vst.msk [vmem:[#allocation4 + $0x10] sm:$0xff] %vm390, 0.0
          %398 = vst.msk [vmem:[#allocation4 + $0x18] sm:$0xff] %vm390, 0.0
          %399 = vst.msk [vmem:[#allocation5] sm:$0xff] %vm385, 0.0
          %400 = vst.msk [vmem:[#allocation5 + $0x8] sm:$0xff] %vm385, 0.0
          %401 = vst.msk [vmem:[#allocation5 + $0x10] sm:$0xff] %vm385, 0.0
          %402 = vst.msk [vmem:[#allocation5 + $0x18] sm:$0xff] %vm385, 0.0
        $region52: #{tpu_custom_call.1} parent=35 // pred_fallthru
          _
        %v403 = vld [vmem:[#allocation2] sm:$0xff]
        %v404 = vld [vmem:[#allocation2 + $0x8] sm:$0xff]
        %v405 = vld [vmem:[#allocation2 + $0x10] sm:$0xff]
        %v406 = vld [vmem:[#allocation2 + $0x18] sm:$0xff]
        %v407 = vld [vmem:[%s313] sm:$0xff]
        %v408 = vld [vmem:[%s313 + $0x8] sm:$0xff]
        %v409 = vld [vmem:[%s313 + $0x10] sm:$0xff]
        %v410 = vld [vmem:[%s313 + $0x18] sm:$0xff]
        %v411 = vld [vmem:[%s371] sm:$0x1]
        %v413 = vlaneseq
        %v414 = vshrl.u32 %v413, 7
        %v415 = vsub.s32 0, %v414
        %v416 = vrot.slane %v411, %v415
        %vm418 = vcmask 261120
        %v420 = vsel %vm418, %v403, 0
        %v423 = vsel %vm418, %v407, 0
        %425 = vmatprep.subr.mxu0 0.0
        %426 = vmatpush1.xpose.msra.mxu0 %v423
        %427 = vmatprep.subr.mxu0 0.0
        %428 = vmatpush1.xpose.msra.mxu0 0.0
        %429 = vmatprep.subr.mxu0 0.0
        %430 = vmatpush1.xpose.msra.mxu0 0.0
        %431 = vmatprep.subr.mxu0 0.0
        %432 = vmatpush1.xpose.msra.mxu0 0.0
        %433 = vmatprep.subr.mxu0 0.0
        %434 = vmatpush1.xpose.msra.mxu0 0.0
        %435 = vmatprep.subr.mxu0 0.0
        %436 = vmatpush1.xpose.msra.mxu0 0.0
        %437 = vmatprep.subr.mxu0 0.0
        %438 = vmatpush1.xpose.msra.mxu0 0.0
        %439 = vmatprep.subr.mxu0 0.0
        %440 = vmatpush1.xpose.msra.mxu0 0.0
        %441 = vmatprep.subr.mxu0 0.0
        %442 = vmatpush1.xpose.msra.mxu0 0.0
        %443 = vmatprep.subr.mxu0 0.0
        %444 = vmatpush1.xpose.msra.mxu0 0.0
        %445 = vmatprep.subr.mxu0 0.0
        %446 = vmatpush1.xpose.msra.mxu0 0.0
        %447 = vmatprep.subr.mxu0 0.0
        %448 = vmatpush1.xpose.msra.mxu0 0.0
        %449 = vmatprep.subr.mxu0 0.0
        %450 = vmatpush1.xpose.msra.mxu0 0.0
        %451 = vmatprep.subr.mxu0 0.0
        %452 = vmatpush1.xpose.msra.mxu0 0.0
        %453 = vmatprep.subr.mxu0 0.0
        %454 = vmatpush1.xpose.msra.mxu0 0.0
        %455 = vmatprep.subr.mxu0 0.0
        %456 = vmatpush1.xpose.msra.mxu0 0.0
        %457 = vmatprep.subr.mxu0 0.0
        %458 = vmatpush1.xpose.msra.mxu0 0.0
        %459 = vmatprep.subr.mxu0 0.0
        %460 = vmatpush1.xpose.msra.mxu0 0.0
        %461 = vmatprep.subr.mxu0 0.0
        %462 = vmatpush1.xpose.msra.mxu0 0.0
        %463 = vmatprep.subr.mxu0 0.0
        %464 = vmatpush1.xpose.msra.mxu0 0.0
        %465 = vmatprep.subr.mxu0 0.0
        %466 = vmatpush1.xpose.msra.mxu0 0.0
        %467 = vmatprep.subr.mxu0 0.0
        %468 = vmatpush1.xpose.msra.mxu0 0.0
        %469 = vmatprep.subr.mxu0 0.0
        %470 = vmatpush1.xpose.msra.mxu0 0.0
        %471 = vmatprep.subr.mxu0 0.0
        %472 = vmatpush1.xpose.msra.mxu0 0.0
        %473 = vmatprep.subr.mxu0 0.0
        %474 = vmatpush1.xpose.msra.mxu0 0.0
        %475 = vmatprep.subr.mxu0 0.0
        %476 = vmatpush1.xpose.msra.mxu0 0.0
        %477 = vmatprep.subr.mxu0 0.0
        %478 = vmatpush1.xpose.msra.mxu0 0.0
        %479 = vmatprep.subr.mxu0 0.0
        %480 = vmatpush1.xpose.msra.mxu0 0.0
        %481 = vmatprep.subr.mxu0 0.0
        %482 = vmatpush1.xpose.msra.mxu0 0.0
        %483 = vmatprep.subr.mxu0 0.0
        %484 = vmatpush1.xpose.msra.mxu0 0.0
        %485 = vmatprep.subr.mxu0 0.0
        %486 = vmatpush1.xpose.msra.mxu0 0.0
        %487 = vmatprep.subr.mxu0 0.0
        %488 = vmatpush1.xpose.msra.mxu0 0.0
        %489 = vmatprep.mubr.f32.mxu0 0.0
        %490 = vmatmul.mubr.f32.gmra.mrb[0].mxu0 %v420
        %v491 = vpop.f32.mrb[0].mxu0
        %v492 = vadd.f32 %v416, %v491
        %v493 = vpop.f32.mrb[0].mxu0
        %494 = vdwg.mxu0
        %v496 = vsel %vm418, %v404, 0
        %v499 = vsel %vm418, %v408, 0
        %501 = vmatprep.subr.mxu0 0.0
        %502 = vmatpush1.xpose.msra.mxu0 %v499
        %503 = vmatprep.subr.mxu0 0.0
        %504 = vmatpush1.xpose.msra.mxu0 0.0
        %505 = vmatprep.subr.mxu0 0.0
        %506 = vmatpush1.xpose.msra.mxu0 0.0
        %507 = vmatprep.subr.mxu0 0.0
        %508 = vmatpush1.xpose.msra.mxu0 0.0
        %509 = vmatprep.subr.mxu0 0.0
        %510 = vmatpush1.xpose.msra.mxu0 0.0
        %511 = vmatprep.subr.mxu0 0.0
        %512 = vmatpush1.xpose.msra.mxu0 0.0
        %513 = vmatprep.subr.mxu0 0.0
        %514 = vmatpush1.xpose.msra.mxu0 0.0
        %515 = vmatprep.subr.mxu0 0.0
        %516 = vmatpush1.xpose.msra.mxu0 0.0
        %517 = vmatprep.subr.mxu0 0.0
        %518 = vmatpush1.xpose.msra.mxu0 0.0
        %519 = vmatprep.subr.mxu0 0.0
        %520 = vmatpush1.xpose.msra.mxu0 0.0
        %521 = vmatprep.subr.mxu0 0.0
        %522 = vmatpush1.xpose.msra.mxu0 0.0
        %523 = vmatprep.subr.mxu0 0.0
        %524 = vmatpush1.xpose.msra.mxu0 0.0
        %525 = vmatprep.subr.mxu0 0.0
        %526 = vmatpush1.xpose.msra.mxu0 0.0
        %527 = vmatprep.subr.mxu0 0.0
        %528 = vmatpush1.xpose.msra.mxu0 0.0
        %529 = vmatprep.subr.mxu0 0.0
        %530 = vmatpush1.xpose.msra.mxu0 0.0
        %531 = vmatprep.subr.mxu0 0.0
        %532 = vmatpush1.xpose.msra.mxu0 0.0
        %533 = vmatprep.subr.mxu0 0.0
        %534 = vmatpush1.xpose.msra.mxu0 0.0
        %535 = vmatprep.subr.mxu0 0.0
        %536 = vmatpush1.xpose.msra.mxu0 0.0
        %537 = vmatprep.subr.mxu0 0.0
        %538 = vmatpush1.xpose.msra.mxu0 0.0
        %539 = vmatprep.subr.mxu0 0.0
        %540 = vmatpush1.xpose.msra.mxu0 0.0
        %541 = vmatprep.subr.mxu0 0.0
        %542 = vmatpush1.xpose.msra.mxu0 0.0
        %543 = vmatprep.subr.mxu0 0.0
        %544 = vmatpush1.xpose.msra.mxu0 0.0
        %545 = vmatprep.subr.mxu0 0.0
        %546 = vmatpush1.xpose.msra.mxu0 0.0
        %547 = vmatprep.subr.mxu0 0.0
        %548 = vmatpush1.xpose.msra.mxu0 0.0
        %549 = vmatprep.subr.mxu0 0.0
        %550 = vmatpush1.xpose.msra.mxu0 0.0
        %551 = vmatprep.subr.mxu0 0.0
        %552 = vmatpush1.xpose.msra.mxu0 0.0
        %553 = vmatprep.subr.mxu0 0.0
        %554 = vmatpush1.xpose.msra.mxu0 0.0
        %555 = vmatprep.subr.mxu0 0.0
        %556 = vmatpush1.xpose.msra.mxu0 0.0
        %557 = vmatprep.subr.mxu0 0.0
        %558 = vmatpush1.xpose.msra.mxu0 0.0
        %559 = vmatprep.subr.mxu0 0.0
        %560 = vmatpush1.xpose.msra.mxu0 0.0
        %561 = vmatprep.subr.mxu0 0.0
        %562 = vmatpush1.xpose.msra.mxu0 0.0
        %563 = vmatprep.subr.mxu0 0.0
        %564 = vmatpush1.xpose.msra.mxu0 0.0
        %565 = vmatprep.mubr.f32.mxu0 0.0
        %566 = vmatmul.mubr.f32.gmra.mrb[0].mxu0 %v496
        %v567 = vpop.f32.mrb[0].mxu0
        %v568 = vadd.f32 %v416, %v567
        %v569 = vpop.f32.mrb[0].mxu0
        %570 = vdwg.mxu0
        %v572 = vsel %vm418, %v405, 0
        %v575 = vsel %vm418, %v409, 0
        %577 = vmatprep.subr.mxu0 0.0
        %578 = vmatpush1.xpose.msra.mxu0 %v575
        %579 = vmatprep.subr.mxu0 0.0
        %580 = vmatpush1.xpose.msra.mxu0 0.0
        %581 = vmatprep.subr.mxu0 0.0
        %582 = vmatpush1.xpose.msra.mxu0 0.0
        %583 = vmatprep.subr.mxu0 0.0
        %584 = vmatpush1.xpose.msra.mxu0 0.0
        %585 = vmatprep.subr.mxu0 0.0
        %586 = vmatpush1.xpose.msra.mxu0 0.0
        %587 = vmatprep.subr.mxu0 0.0
        %588 = vmatpush1.xpose.msra.mxu0 0.0
        %589 = vmatprep.subr.mxu0 0.0
        %590 = vmatpush1.xpose.msra.mxu0 0.0
        %591 = vmatprep.subr.mxu0 0.0
        %592 = vmatpush1.xpose.msra.mxu0 0.0
        %593 = vmatprep.subr.mxu0 0.0
        %594 = vmatpush1.xpose.msra.mxu0 0.0
        %595 = vmatprep.subr.mxu0 0.0
        %596 = vmatpush1.xpose.msra.mxu0 0.0
        %597 = vmatprep.subr.mxu0 0.0
        %598 = vmatpush1.xpose.msra.mxu0 0.0
        %599 = vmatprep.subr.mxu0 0.0
        %600 = vmatpush1.xpose.msra.mxu0 0.0
        %601 = vmatprep.subr.mxu0 0.0
        %602 = vmatpush1.xpose.msra.mxu0 0.0
        %603 = vmatprep.subr.mxu0 0.0
        %604 = vmatpush1.xpose.msra.mxu0 0.0
        %605 = vmatprep.subr.mxu0 0.0
        %606 = vmatpush1.xpose.msra.mxu0 0.0
        %607 = vmatprep.subr.mxu0 0.0
        %608 = vmatpush1.xpose.msra.mxu0 0.0
        %609 = vmatprep.subr.mxu0 0.0
        %610 = vmatpush1.xpose.msra.mxu0 0.0
        %611 = vmatprep.subr.mxu0 0.0
        %612 = vmatpush1.xpose.msra.mxu0 0.0
        %613 = vmatprep.subr.mxu0 0.0
        %614 = vmatpush1.xpose.msra.mxu0 0.0
        %615 = vmatprep.subr.mxu0 0.0
        %616 = vmatpush1.xpose.msra.mxu0 0.0
        %617 = vmatprep.subr.mxu0 0.0
        %618 = vmatpush1.xpose.msra.mxu0 0.0
        %619 = vmatprep.subr.mxu0 0.0
        %620 = vmatpush1.xpose.msra.mxu0 0.0
        %621 = vmatprep.subr.mxu0 0.0
        %622 = vmatpush1.xpose.msra.mxu0 0.0
        %623 = vmatprep.subr.mxu0 0.0
        %624 = vmatpush1.xpose.msra.mxu0 0.0
        %625 = vmatprep.subr.mxu0 0.0
        %626 = vmatpush1.xpose.msra.mxu0 0.0
        %627 = vmatprep.subr.mxu0 0.0
        %628 = vmatpush1.xpose.msra.mxu0 0.0
        %629 = vmatprep.subr.mxu0 0.0
        %630 = vmatpush1.xpose.msra.mxu0 0.0
        %631 = vmatprep.subr.mxu0 0.0
        %632 = vmatpush1.xpose.msra.mxu0 0.0
        %633 = vmatprep.subr.mxu0 0.0
        %634 = vmatpush1.xpose.msra.mxu0 0.0
        %635 = vmatprep.subr.mxu0 0.0
        %636 = vmatpush1.xpose.msra.mxu0 0.0
        %637 = vmatprep.subr.mxu0 0.0
        %638 = vmatpush1.xpose.msra.mxu0 0.0
        %639 = vmatprep.subr.mxu0 0.0
        %640 = vmatpush1.xpose.msra.mxu0 0.0
        %641 = vmatprep.mubr.f32.mxu0 0.0
        %642 = vmatmul.mubr.f32.gmra.mrb[0].mxu0 %v572
        %v643 = vpop.f32.mrb[0].mxu0
        %v644 = vadd.f32 %v416, %v643
        %v645 = vpop.f32.mrb[0].mxu0
        %646 = vdwg.mxu0
        %v648 = vsel %vm418, %v406, 0
        %v651 = vsel %vm418, %v410, 0
        %653 = vmatprep.subr.mxu0 0.0
        %654 = vmatpush1.xpose.msra.mxu0 %v651
        %655 = vmatprep.subr.mxu0 0.0
        %656 = vmatpush1.xpose.msra.mxu0 0.0
        %657 = vmatprep.subr.mxu0 0.0
        %658 = vmatpush1.xpose.msra.mxu0 0.0
        %659 = vmatprep.subr.mxu0 0.0
        %660 = vmatpush1.xpose.msra.mxu0 0.0
        %661 = vmatprep.subr.mxu0 0.0
        %662 = vmatpush1.xpose.msra.mxu0 0.0
        %663 = vmatprep.subr.mxu0 0.0
        %664 = vmatpush1.xpose.msra.mxu0 0.0
        %665 = vmatprep.subr.mxu0 0.0
        %666 = vmatpush1.xpose.msra.mxu0 0.0
        %667 = vmatprep.subr.mxu0 0.0
        %668 = vmatpush1.xpose.msra.mxu0 0.0
        %669 = vmatprep.subr.mxu0 0.0
        %670 = vmatpush1.xpose.msra.mxu0 0.0
        %671 = vmatprep.subr.mxu0 0.0
        %672 = vmatpush1.xpose.msra.mxu0 0.0
        %673 = vmatprep.subr.mxu0 0.0
        %674 = vmatpush1.xpose.msra.mxu0 0.0
        %675 = vmatprep.subr.mxu0 0.0
        %676 = vmatpush1.xpose.msra.mxu0 0.0
        %677 = vmatprep.subr.mxu0 0.0
        %678 = vmatpush1.xpose.msra.mxu0 0.0
        %679 = vmatprep.subr.mxu0 0.0
        %680 = vmatpush1.xpose.msra.mxu0 0.0
        %681 = vmatprep.subr.mxu0 0.0
        %682 = vmatpush1.xpose.msra.mxu0 0.0
        %683 = vmatprep.subr.mxu0 0.0
        %684 = vmatpush1.xpose.msra.mxu0 0.0
        %685 = vmatprep.subr.mxu0 0.0
        %686 = vmatpush1.xpose.msra.mxu0 0.0
        %687 = vmatprep.subr.mxu0 0.0
        %688 = vmatpush1.xpose.msra.mxu0 0.0
        %689 = vmatprep.subr.mxu0 0.0
        %690 = vmatpush1.xpose.msra.mxu0 0.0
        %691 = vmatprep.subr.mxu0 0.0
        %692 = vmatpush1.xpose.msra.mxu0 0.0
        %693 = vmatprep.subr.mxu0 0.0
        %694 = vmatpush1.xpose.msra.mxu0 0.0
        %695 = vmatprep.subr.mxu0 0.0
        %696 = vmatpush1.xpose.msra.mxu0 0.0
        %697 = vmatprep.subr.mxu0 0.0
        %698 = vmatpush1.xpose.msra.mxu0 0.0
        %699 = vmatprep.subr.mxu0 0.0
        %700 = vmatpush1.xpose.msra.mxu0 0.0
        %701 = vmatprep.subr.mxu0 0.0
        %702 = vmatpush1.xpose.msra.mxu0 0.0
        %703 = vmatprep.subr.mxu0 0.0
        %704 = vmatpush1.xpose.msra.mxu0 0.0
        %705 = vmatprep.subr.mxu0 0.0
        %706 = vmatpush1.xpose.msra.mxu0 0.0
        %707 = vmatprep.subr.mxu0 0.0
        %708 = vmatpush1.xpose.msra.mxu0 0.0
        %709 = vmatprep.subr.mxu0 0.0
        %710 = vmatpush1.xpose.msra.mxu0 0.0
        %711 = vmatprep.subr.mxu0 0.0
        %712 = vmatpush1.xpose.msra.mxu0 0.0
        %713 = vmatprep.subr.mxu0 0.0
        %714 = vmatpush1.xpose.msra.mxu0 0.0
        %715 = vmatprep.subr.mxu0 0.0
        %716 = vmatpush1.xpose.msra.mxu0 0.0
        %717 = vmatprep.mubr.f32.mxu0 0.0
        %718 = vmatmul.mubr.f32.gmra.mrb[0].mxu0 %v648
        %v719 = vpop.f32.mrb[0].mxu0
        %v720 = vadd.f32 %v416, %v719
        %v721 = vpop.f32.mrb[0].mxu0
        %722 = vdwg.mxu0
        %v723 = vld [vmem:[#allocation3] sm:$0xff]
        %v724 = vld [vmem:[#allocation3 + $0x8] sm:$0xff]
        %v725 = vld [vmem:[#allocation3 + $0x10] sm:$0xff]
        %v726 = vld [vmem:[#allocation3 + $0x18] sm:$0xff]
        %vm727 = vcmask 64512
        %v728 = vsel %vm727, %v492, -inf
        %729 = vmax.xlane.f32.xlu0 %v728
        %v730 = vpop.xlane.xlu0 %729
        %v731 = vsel %vm727, %v568, -inf
        %732 = vmax.xlane.f32.xlu0 %v731
        %v733 = vpop.xlane.xlu0 %732
        %v734 = vsel %vm727, %v644, -inf
        %735 = vmax.xlane.f32.xlu0 %v734
        %v736 = vpop.xlane.xlu0 %735
        %v737 = vsel %vm727, %v720, -inf
        %738 = vmax.xlane.f32.xlu0 %v737
        %v739 = vpop.xlane.xlu0 %738
        %v740 = vmax.f32 %v723, %v730
        %v741 = vmax.f32 %v724, %v733
        %v742 = vmax.f32 %v725, %v736
        %v743 = vmax.f32 %v726, %v739
        %v744 = vsub.f32 %v723, %v740
        %v745 = vsub.f32 %v724, %v741
        %v746 = vsub.f32 %v725, %v742
        %v747 = vsub.f32 %v726, %v743
        %v748 = vmul.f32 %v744, 1.442695
        %v749 = vpow.pop %v748
        %v750 = vmul.f32 %v745, 1.442695
        %v751 = vpow.pop %v750
        %v752 = vmul.f32 %v746, 1.442695
        %v753 = vpow.pop %v752
        %v754 = vmul.f32 %v747, 1.442695
        %v755 = vpow.pop %v754
        %757 = vset.pattern.permute.xlu0 0
        %758 = vperm.xlu0 %757, %v740
        %v759 = vpop.permute.xlu0 %758
        %762 = vset.pattern.permute.xlu0 0
        %763 = vperm.xlu0 %762, %v741
        %v764 = vpop.permute.xlu0 %763
        %767 = vset.pattern.permute.xlu0 0
        %768 = vperm.xlu0 %767, %v742
        %v769 = vpop.permute.xlu0 %768
        %772 = vset.pattern.permute.xlu0 0
        %773 = vperm.xlu0 %772, %v743
        %v774 = vpop.permute.xlu0 %773
        %v776 = vsub.f32 %v492, %v759
        %v777 = vsub.f32 %v568, %v764
        %v778 = vsub.f32 %v644, %v769
        %v779 = vsub.f32 %v720, %v774
        %v780 = vmul.f32 %v776, 1.442695
        %v781 = vpow.pop %v780
        %v782 = vmul.f32 %v777, 1.442695
        %v783 = vpow.pop %v782
        %v784 = vmul.f32 %v778, 1.442695
        %v785 = vpow.pop %v784
        %v786 = vmul.f32 %v779, 1.442695
        %v787 = vpow.pop %v786
        %v788 = vsel %vm727, %v781, 0.0
        %789 = vadd.xlane.f32.xlu0 %v788
        %v790 = vpop.xlane.xlu0 %789
        %v791 = vsel %vm727, %v783, 0.0
        %792 = vadd.xlane.f32.xlu0 %v791
        %v793 = vpop.xlane.xlu0 %792
        %v794 = vsel %vm727, %v785, 0.0
        %795 = vadd.xlane.f32.xlu0 %v794
        %v796 = vpop.xlane.xlu0 %795
        %v797 = vsel %vm727, %v787, 0.0
        %798 = vadd.xlane.f32.xlu0 %v797
        %v799 = vpop.xlane.xlu0 %798
        %v800 = vld [vmem:[#allocation4] sm:$0xff]
        %v801 = vld [vmem:[#allocation4 + $0x8] sm:$0xff]
        %v802 = vld [vmem:[#allocation4 + $0x10] sm:$0xff]
        %v803 = vld [vmem:[#allocation4 + $0x18] sm:$0xff]
        %v804 = vmul.f32 %v749, %v800
        %v805 = vmul.f32 %v751, %v801
        %v806 = vmul.f32 %v753, %v802
        %v807 = vmul.f32 %v755, %v803
        %v808 = vadd.f32 %v804, %v790
        %v809 = vadd.f32 %v805, %v793
        %v810 = vadd.f32 %v806, %v796
        %v811 = vadd.f32 %v807, %v799
        %vm812 = vcmask 7168
        %813 = vst.msk [vmem:[#allocation4] sm:$0xff] %vm812, %v808
        %814 = vst.msk [vmem:[#allocation4 + $0x8] sm:$0xff] %vm812, %v809
        %815 = vst.msk [vmem:[#allocation4 + $0x10] sm:$0xff] %vm812, %v810
        %816 = vst.msk [vmem:[#allocation4 + $0x18] sm:$0xff] %vm812, %v811
        %v817 = vld [vmem:[#allocation5] sm:$0xff]
        %v818 = vld [vmem:[#allocation5 + $0x8] sm:$0xff]
        %v819 = vld [vmem:[#allocation5 + $0x10] sm:$0xff]
        %v820 = vld [vmem:[#allocation5 + $0x18] sm:$0xff]
        %822 = vset.pattern.permute.xlu0 0
        %823 = vperm.xlu0 %822, %v749
        %v824 = vpop.permute.xlu0 %823
        %827 = vset.pattern.permute.xlu0 0
        %828 = vperm.xlu0 %827, %v751
        %v829 = vpop.permute.xlu0 %828
        %832 = vset.pattern.permute.xlu0 0
        %833 = vperm.xlu0 %832, %v753
        %v834 = vpop.permute.xlu0 %833
        %837 = vset.pattern.permute.xlu0 0
        %838 = vperm.xlu0 %837, %v755
        %v839 = vpop.permute.xlu0 %838
        %v841 = vmul.f32 %v824, %v817
        %v842 = vmul.f32 %v829, %v818
        %v843 = vmul.f32 %v834, %v819
        %v844 = vmul.f32 %v839, %v820
        %v845 = vld [vmem:[%s322] sm:$0xff]
        %v846 = vld [vmem:[%s322 + $0x8] sm:$0xff]
        %v847 = vld [vmem:[%s322 + $0x10] sm:$0xff]
        %v848 = vld [vmem:[%s322 + $0x18] sm:$0xff]
        %v850 = vsel %vm727, %v781, 0
        %852 = vmatprep.subr.mxu0 0.0
        %853 = vmatpush1.msra.mxu0 %v845
        %854 = vmatprep.subr.mxu0 0.0
        %855 = vmatpush1.msra.mxu0 0.0
        %856 = vmatprep.subr.mxu0 0.0
        %857 = vmatpush1.msra.mxu0 0.0
        %858 = vmatprep.subr.mxu0 0.0
        %859 = vmatpush1.msra.mxu0 0.0
        %860 = vmatprep.subr.mxu0 0.0
        %861 = vmatpush1.msra.mxu0 0.0
        %862 = vmatprep.subr.mxu0 0.0
        %863 = vmatpush1.msra.mxu0 0.0
        %864 = vmatprep.subr.mxu0 0.0
        %865 = vmatpush1.msra.mxu0 0.0
        %866 = vmatprep.subr.mxu0 0.0
        %867 = vmatpush1.msra.mxu0 0.0
        %868 = vmatprep.subr.mxu0 0.0
        %869 = vmatpush1.msra.mxu0 0.0
        %870 = vmatprep.subr.mxu0 0.0
        %871 = vmatpush1.msra.mxu0 0.0
        %872 = vmatprep.subr.mxu0 0.0
        %873 = vmatpush1.msra.mxu0 0.0
        %874 = vmatprep.subr.mxu0 0.0
        %875 = vmatpush1.msra.mxu0 0.0
        %876 = vmatprep.subr.mxu0 0.0
        %877 = vmatpush1.msra.mxu0 0.0
        %878 = vmatprep.subr.mxu0 0.0
        %879 = vmatpush1.msra.mxu0 0.0
        %880 = vmatprep.subr.mxu0 0.0
        %881 = vmatpush1.msra.mxu0 0.0
        %882 = vmatprep.subr.mxu0 0.0
        %883 = vmatpush1.msra.mxu0 0.0
        %884 = vmatprep.subr.mxu0 0.0
        %885 = vmatpush1.msra.mxu0 0.0
        %886 = vmatprep.subr.mxu0 0.0
        %887 = vmatpush1.msra.mxu0 0.0
        %888 = vmatprep.subr.mxu0 0.0
        %889 = vmatpush1.msra.mxu0 0.0
        %890 = vmatprep.subr.mxu0 0.0
        %891 = vmatpush1.msra.mxu0 0.0
        %892 = vmatprep.subr.mxu0 0.0
        %893 = vmatpush1.msra.mxu0 0.0
        %894 = vmatprep.subr.mxu0 0.0
        %895 = vmatpush1.msra.mxu0 0.0
        %896 = vmatprep.subr.mxu0 0.0
        %897 = vmatpush1.msra.mxu0 0.0
        %898 = vmatprep.subr.mxu0 0.0
        %899 = vmatpush1.msra.mxu0 0.0
        %900 = vmatprep.subr.mxu0 0.0
        %901 = vmatpush1.msra.mxu0 0.0
        %902 = vmatprep.subr.mxu0 0.0
        %903 = vmatpush1.msra.mxu0 0.0
        %904 = vmatprep.subr.mxu0 0.0
        %905 = vmatpush1.msra.mxu0 0.0
        %906 = vmatprep.subr.mxu0 0.0
        %907 = vmatpush1.msra.mxu0 0.0
        %908 = vmatprep.subr.mxu0 0.0
        %909 = vmatpush1.msra.mxu0 0.0
        %910 = vmatprep.subr.mxu0 0.0
        %911 = vmatpush1.msra.mxu0 0.0
        %912 = vmatprep.subr.mxu0 0.0
        %913 = vmatpush1.msra.mxu0 0.0
        %914 = vmatprep.subr.mxu0 0.0
        %915 = vmatpush1.msra.mxu0 0.0
        %916 = vmatprep.mubr.f32.mxu0 0.0
        %917 = vmatmul.mubr.f32.gmra.mrb[0].mxu0 %v850
        %v918 = vpop.f32.mrb[0].mxu0
        %v919 = vadd.f32 0.0, %v918
        %v920 = vpop.f32.mrb[0].mxu0
        %921 = vdwg.mxu0
        %v923 = vsel %vm727, %v783, 0
        %925 = vmatprep.subr.mxu0 0.0
        %926 = vmatpush1.msra.mxu0 %v846
        %927 = vmatprep.subr.mxu0 0.0
        %928 = vmatpush1.msra.mxu0 0.0
        %929 = vmatprep.subr.mxu0 0.0
        %930 = vmatpush1.msra.mxu0 0.0
        %931 = vmatprep.subr.mxu0 0.0
        %932 = vmatpush1.msra.mxu0 0.0
        %933 = vmatprep.subr.mxu0 0.0
        %934 = vmatpush1.msra.mxu0 0.0
        %935 = vmatprep.subr.mxu0 0.0
        %936 = vmatpush1.msra.mxu0 0.0
        %937 = vmatprep.subr.mxu0 0.0
        %938 = vmatpush1.msra.mxu0 0.0
        %939 = vmatprep.subr.mxu0 0.0
        %940 = vmatpush1.msra.mxu0 0.0
        %941 = vmatprep.subr.mxu0 0.0
        %942 = vmatpush1.msra.mxu0 0.0
        %943 = vmatprep.subr.mxu0 0.0
        %944 = vmatpush1.msra.mxu0 0.0
        %945 = vmatprep.subr.mxu0 0.0
        %946 = vmatpush1.msra.mxu0 0.0
        %947 = vmatprep.subr.mxu0 0.0
        %948 = vmatpush1.msra.mxu0 0.0
        %949 = vmatprep.subr.mxu0 0.0
        %950 = vmatpush1.msra.mxu0 0.0
        %951 = vmatprep.subr.mxu0 0.0
        %952 = vmatpush1.msra.mxu0 0.0
        %953 = vmatprep.subr.mxu0 0.0
        %954 = vmatpush1.msra.mxu0 0.0
        %955 = vmatprep.subr.mxu0 0.0
        %956 = vmatpush1.msra.mxu0 0.0
        %957 = vmatprep.subr.mxu0 0.0
        %958 = vmatpush1.msra.mxu0 0.0
        %959 = vmatprep.subr.mxu0 0.0
        %960 = vmatpush1.msra.mxu0 0.0
        %961 = vmatprep.subr.mxu0 0.0
        %962 = vmatpush1.msra.mxu0 0.0
        %963 = vmatprep.subr.mxu0 0.0
        %964 = vmatpush1.msra.mxu0 0.0
        %965 = vmatprep.subr.mxu0 0.0
        %966 = vmatpush1.msra.mxu0 0.0
        %967 = vmatprep.subr.mxu0 0.0
        %968 = vmatpush1.msra.mxu0 0.0
        %969 = vmatprep.subr.mxu0 0.0
        %970 = vmatpush1.msra.mxu0 0.0
        %971 = vmatprep.subr.mxu0 0.0
        %972 = vmatpush1.msra.mxu0 0.0
        %973 = vmatprep.subr.mxu0 0.0
        %974 = vmatpush1.msra.mxu0 0.0
        %975 = vmatprep.subr.mxu0 0.0
        %976 = vmatpush1.msra.mxu0 0.0
        %977 = vmatprep.subr.mxu0 0.0
        %978 = vmatpush1.msra.mxu0 0.0
        %979 = vmatprep.subr.mxu0 0.0
        %980 = vmatpush1.msra.mxu0 0.0
        %981 = vmatprep.subr.mxu0 0.0
        %982 = vmatpush1.msra.mxu0 0.0
        %983 = vmatprep.subr.mxu0 0.0
        %984 = vmatpush1.msra.mxu0 0.0
        %985 = vmatprep.subr.mxu0 0.0
        %986 = vmatpush1.msra.mxu0 0.0
        %987 = vmatprep.subr.mxu0 0.0
        %988 = vmatpush1.msra.mxu0 0.0
        %989 = vmatprep.mubr.f32.mxu0 0.0
        %990 = vmatmul.mubr.f32.gmra.mrb[0].mxu0 %v923
        %v991 = vpop.f32.mrb[0].mxu0
        %v992 = vadd.f32 0.0, %v991
        %v993 = vpop.f32.mrb[0].mxu0
        %994 = vdwg.mxu0
        %v996 = vsel %vm727, %v785, 0
        %998 = vmatprep.subr.mxu0 0.0
        %999 = vmatpush1.msra.mxu0 %v847
        %1000 = vmatprep.subr.mxu0 0.0
        %1001 = vmatpush1.msra.mxu0 0.0
        %1002 = vmatprep.subr.mxu0 0.0
        %1003 = vmatpush1.msra.mxu0 0.0
        %1004 = vmatprep.subr.mxu0 0.0
        %1005 = vmatpush1.msra.mxu0 0.0
        %1006 = vmatprep.subr.mxu0 0.0
        %1007 = vmatpush1.msra.mxu0 0.0
        %1008 = vmatprep.subr.mxu0 0.0
        %1009 = vmatpush1.msra.mxu0 0.0
        %1010 = vmatprep.subr.mxu0 0.0
        %1011 = vmatpush1.msra.mxu0 0.0
        %1012 = vmatprep.subr.mxu0 0.0
        %1013 = vmatpush1.msra.mxu0 0.0
        %1014 = vmatprep.subr.mxu0 0.0
        %1015 = vmatpush1.msra.mxu0 0.0
        %1016 = vmatprep.subr.mxu0 0.0
        %1017 = vmatpush1.msra.mxu0 0.0
        %1018 = vmatprep.subr.mxu0 0.0
        %1019 = vmatpush1.msra.mxu0 0.0
        %1020 = vmatprep.subr.mxu0 0.0
        %1021 = vmatpush1.msra.mxu0 0.0
        %1022 = vmatprep.subr.mxu0 0.0
        %1023 = vmatpush1.msra.mxu0 0.0
        %1024 = vmatprep.subr.mxu0 0.0
        %1025 = vmatpush1.msra.mxu0 0.0
        %1026 = vmatprep.subr.mxu0 0.0
        %1027 = vmatpush1.msra.mxu0 0.0
        %1028 = vmatprep.subr.mxu0 0.0
        %1029 = vmatpush1.msra.mxu0 0.0
        %1030 = vmatprep.subr.mxu0 0.0
        %1031 = vmatpush1.msra.mxu0 0.0
        %1032 = vmatprep.subr.mxu0 0.0
        %1033 = vmatpush1.msra.mxu0 0.0
        %1034 = vmatprep.subr.mxu0 0.0
        %1035 = vmatpush1.msra.mxu0 0.0
        %1036 = vmatprep.subr.mxu0 0.0
        %1037 = vmatpush1.msra.mxu0 0.0
        %1038 = vmatprep.subr.mxu0 0.0
        %1039 = vmatpush1.msra.mxu0 0.0
        %1040 = vmatprep.subr.mxu0 0.0
        %1041 = vmatpush1.msra.mxu0 0.0
        %1042 = vmatprep.subr.mxu0 0.0
        %1043 = vmatpush1.msra.mxu0 0.0
        %1044 = vmatprep.subr.mxu0 0.0
        %1045 = vmatpush1.msra.mxu0 0.0
        %1046 = vmatprep.subr.mxu0 0.0
        %1047 = vmatpush1.msra.mxu0 0.0
        %1048 = vmatprep.subr.mxu0 0.0
        %1049 = vmatpush1.msra.mxu0 0.0
        %1050 = vmatprep.subr.mxu0 0.0
        %1051 = vmatpush1.msra.mxu0 0.0
        %1052 = vmatprep.subr.mxu0 0.0
        %1053 = vmatpush1.msra.mxu0 0.0
        %1054 = vmatprep.subr.mxu0 0.0
        %1055 = vmatpush1.msra.mxu0 0.0
        %1056 = vmatprep.subr.mxu0 0.0
        %1057 = vmatpush1.msra.mxu0 0.0
        %1058 = vmatprep.subr.mxu0 0.0
        %1059 = vmatpush1.msra.mxu0 0.0
        %1060 = vmatprep.subr.mxu0 0.0
        %1061 = vmatpush1.msra.mxu0 0.0
        %1062 = vmatprep.mubr.f32.mxu0 0.0
        %1063 = vmatmul.mubr.f32.gmra.mrb[0].mxu0 %v996
        %v1064 = vpop.f32.mrb[0].mxu0
        %v1065 = vadd.f32 0.0, %v1064
        %v1066 = vpop.f32.mrb[0].mxu0
        %1067 = vdwg.mxu0
        %v1069 = vsel %vm727, %v787, 0
        %1071 = vmatprep.subr.mxu0 0.0
        %1072 = vmatpush1.msra.mxu0 %v848
        %1073 = vmatprep.subr.mxu0 0.0
        %1074 = vmatpush1.msra.mxu0 0.0
        %1075 = vmatprep.subr.mxu0 0.0
        %1076 = vmatpush1.msra.mxu0 0.0
        %1077 = vmatprep.subr.mxu0 0.0
        %1078 = vmatpush1.msra.mxu0 0.0
        %1079 = vmatprep.subr.mxu0 0.0
        %1080 = vmatpush1.msra.mxu0 0.0
        %1081 = vmatprep.subr.mxu0 0.0
        %1082 = vmatpush1.msra.mxu0 0.0
        %1083 = vmatprep.subr.mxu0 0.0
        %1084 = vmatpush1.msra.mxu0 0.0
        %1085 = vmatprep.subr.mxu0 0.0
        %1086 = vmatpush1.msra.mxu0 0.0
        %1087 = vmatprep.subr.mxu0 0.0
        %1088 = vmatpush1.msra.mxu0 0.0
        %1089 = vmatprep.subr.mxu0 0.0
        %1090 = vmatpush1.msra.mxu0 0.0
        %1091 = vmatprep.subr.mxu0 0.0
        %1092 = vmatpush1.msra.mxu0 0.0
        %1093 = vmatprep.subr.mxu0 0.0
        %1094 = vmatpush1.msra.mxu0 0.0
        %1095 = vmatprep.subr.mxu0 0.0
        %1096 = vmatpush1.msra.mxu0 0.0
        %1097 = vmatprep.subr.mxu0 0.0
        %1098 = vmatpush1.msra.mxu0 0.0
        %1099 = vmatprep.subr.mxu0 0.0
        %1100 = vmatpush1.msra.mxu0 0.0
        %1101 = vmatprep.subr.mxu0 0.0
        %1102 = vmatpush1.msra.mxu0 0.0
        %1103 = vmatprep.subr.mxu0 0.0
        %1104 = vmatpush1.msra.mxu0 0.0
        %1105 = vmatprep.subr.mxu0 0.0
        %1106 = vmatpush1.msra.mxu0 0.0
        %1107 = vmatprep.subr.mxu0 0.0
        %1108 = vmatpush1.msra.mxu0 0.0
        %1109 = vmatprep.subr.mxu0 0.0
        %1110 = vmatpush1.msra.mxu0 0.0
        %1111 = vmatprep.subr.mxu0 0.0
        %1112 = vmatpush1.msra.mxu0 0.0
        %1113 = vmatprep.subr.mxu0 0.0
        %1114 = vmatpush1.msra.mxu0 0.0
        %1115 = vmatprep.subr.mxu0 0.0
        %1116 = vmatpush1.msra.mxu0 0.0
        %1117 = vmatprep.subr.mxu0 0.0
        %1118 = vmatpush1.msra.mxu0 0.0
        %1119 = vmatprep.subr.mxu0 0.0
        %1120 = vmatpush1.msra.mxu0 0.0
        %1121 = vmatprep.subr.mxu0 0.0
        %1122 = vmatpush1.msra.mxu0 0.0
        %1123 = vmatprep.subr.mxu0 0.0
        %1124 = vmatpush1.msra.mxu0 0.0
        %1125 = vmatprep.subr.mxu0 0.0
        %1126 = vmatpush1.msra.mxu0 0.0
        %1127 = vmatprep.subr.mxu0 0.0
        %1128 = vmatpush1.msra.mxu0 0.0
        %1129 = vmatprep.subr.mxu0 0.0
        %1130 = vmatpush1.msra.mxu0 0.0
        %1131 = vmatprep.subr.mxu0 0.0
        %1132 = vmatpush1.msra.mxu0 0.0
        %1133 = vmatprep.subr.mxu0 0.0
        %1134 = vmatpush1.msra.mxu0 0.0
        %1135 = vmatprep.mubr.f32.mxu0 0.0
        %1136 = vmatmul.mubr.f32.gmra.mrb[0].mxu0 %v1069
        %v1137 = vpop.f32.mrb[0].mxu0
        %v1138 = vadd.f32 0.0, %v1137
        %v1139 = vpop.f32.mrb[0].mxu0
        %1140 = vdwg.mxu0
        %v1141 = vadd.f32 %v841, %v919
        %v1142 = vadd.f32 %v842, %v992
        %v1143 = vadd.f32 %v843, %v1065
        %v1144 = vadd.f32 %v844, %v1138
        %1145 = vst.msk [vmem:[#allocation5] sm:$0xff] %vm418, %v1141
        %1146 = vst.msk [vmem:[#allocation5 + $0x8] sm:$0xff] %vm418, %v1142
        %1147 = vst.msk [vmem:[#allocation5 + $0x10] sm:$0xff] %vm418, %v1143
        %1148 = vst.msk [vmem:[#allocation5 + $0x18] sm:$0xff] %vm418, %v1144
        %1149 = vst.msk [vmem:[#allocation3] sm:$0xff] %vm812, %v740
        %1150 = vst.msk [vmem:[#allocation3 + $0x8] sm:$0xff] %vm812, %v741
        %1151 = vst.msk [vmem:[#allocation3 + $0x10] sm:$0xff] %vm812, %v742
        %1152 = vst.msk [vmem:[#allocation3 + $0x18] sm:$0xff] %vm812, %v743
        // Predicated region
        $region53: #{tpu_custom_call.1} parent=35 // pred_check
          %p1153 = pneg %p373
        $region54: #{tpu_custom_call.1} parent=35 // pred_check_branch
          %1155 = sbr.rel (%p1153) target = $region56
        $region55: #{tpu_custom_call.1} parent=35 // pred_region
          %v1156 = vld [vmem:[#allocation4] sm:$0xff]
          %v1157 = vld [vmem:[#allocation4 + $0x8] sm:$0xff]
          %v1158 = vld [vmem:[#allocation4 + $0x10] sm:$0xff]
          %v1159 = vld [vmem:[#allocation4 + $0x18] sm:$0xff]
          %v1160 = vrcp.pop %v1156
          %v1161 = vrcp.pop %v1157
          %v1162 = vrcp.pop %v1158
          %v1163 = vrcp.pop %v1159
          %v1164 = vmul.f32 %v1156, %v1160
          %v1165 = vmul.f32 %v1157, %v1161
          %v1166 = vmul.f32 %v1158, %v1162
          %v1167 = vmul.f32 %v1159, %v1163
          %v1168 = vsub.f32 2.0, %v1164
          %v1169 = vsub.f32 2.0, %v1165
          %v1170 = vsub.f32 2.0, %v1166
          %v1171 = vsub.f32 2.0, %v1167
          %v1172 = vmul.f32 %v1160, %v1168
          %v1173 = vmul.f32 %v1161, %v1169
          %v1174 = vmul.f32 %v1162, %v1170
          %v1175 = vmul.f32 %v1163, %v1171
          %v1176 = vld [vmem:[#allocation5] sm:$0xff]
          %v1177 = vld [vmem:[#allocation5 + $0x8] sm:$0xff]
          %v1178 = vld [vmem:[#allocation5 + $0x10] sm:$0xff]
          %v1179 = vld [vmem:[#allocation5 + $0x18] sm:$0xff]
          %1181 = vset.pattern.permute.xlu0 0
          %1182 = vperm.xlu0 %1181, %v1172
          %v1183 = vpop.permute.xlu0 %1182
          %1186 = vset.pattern.permute.xlu0 0
          %1187 = vperm.xlu0 %1186, %v1173
          %v1188 = vpop.permute.xlu0 %1187
          %1191 = vset.pattern.permute.xlu0 0
          %1192 = vperm.xlu0 %1191, %v1174
          %v1193 = vpop.permute.xlu0 %1192
          %1196 = vset.pattern.permute.xlu0 0
          %1197 = vperm.xlu0 %1196, %v1175
          %v1198 = vpop.permute.xlu0 %1197
          %v1200 = vmul.f32 %v1176, %v1183
          %v1201 = vmul.f32 %v1177, %v1188
          %v1202 = vmul.f32 %v1178, %v1193
          %v1203 = vmul.f32 %v1179, %v1198
          %1204 = vst.msk [vmem:[%s362] sm:$0xff] %vm418, %v1200
          %1205 = vst.msk [vmem:[%s362 + $0x8] sm:$0xff] %vm418, %v1201
          %1206 = vst.msk [vmem:[%s362 + $0x10] sm:$0xff] %vm418, %v1202
          %1207 = vst.msk [vmem:[%s362 + $0x18] sm:$0xff] %vm418, %v1203
        $region56: #{tpu_custom_call.1} parent=35 // pred_fallthru
          _
        %s1208 = sand.u32 %s180, 1
        %s1209 = scalar_lea.sflag [#allocation8], %s1208
        %s1210 = sand.u32 %s180, 1
        %s1211 = smul.addr %s1210, 32
        %s1212 = scalar_lea.vmem [#allocation12], %s1211
        // Predicated region
        $region57: #{tpu_custom_call.1} parent=35 // pred_check
          %p1213 = pneg %p190
        $region58: #{tpu_custom_call.1} parent=35 // pred_check_branch
          %1215 = sbr.rel (%p1213) target = $region60
        $region59: #{tpu_custom_call.1} parent=35 // pred_region
          %s1216 = smul.u32 4, %s31
          %s1218 = ssub.s32 512, 512
          %1219 = vsyncadd %s1209, %s1218
          %s1220 = sadd.s32 %s32, %s1216
          %s1221 = smul.addr %s30, 4
          %s1222 = sadd.s32 %s1220, %s1221
          %s1223 = smul.addr %s1222, 128
          %s1224 = scalar_lea.hbm %s4, %s1223
          %s1225 = sshll.u32 %s1212, 4
          %s1226 = int_to_ptr.vmem [resolvable:$true] %s1225
          %1231 = dma.vmem_to_hbm [thread:$0]  %s1226, 512, %s1224, %s1209, 128, 128, 8
        $region60: #{tpu_custom_call.1} parent=35 // pred_fallthru
          _
      $region36: #{tpu_custom_call.1} parent=5 // pred_fallthru
        _
      %p1232 = scmp.le.s32.totalorder 2, %s19
      // Predicated region
      $region61: #{tpu_custom_call.1} parent=5 // pred_check
        %p1233 = pneg %p1232
      $region62: #{tpu_custom_call.1} parent=5 // pred_check_branch
        %1235 = sbr.rel (%p1233) target = $region64
      $region63: #{tpu_custom_call.1} parent=5 // pred_region
        %s1236 = ssub.s32 %s19, 2
        // Predicated region
        $region65: #{tpu_custom_call.1} parent=63 // pred_check
          %p1237 = pneg %p196
        $region66: #{tpu_custom_call.1} parent=63 // pred_check_branch
          %1239 = sbr.rel (%p1237) target = $region68
        $region67: #{tpu_custom_call.1} parent=63 // pred_region
          %s1240 = sand.u32 %s181, 1
          %s1241 = scalar_lea.sflag [#allocation8], %s1240
          %s1242 = sand.u32 %s181, 1
          %s1243 = smul.addr %s1242, 32
          %s1244 = scalar_lea.vmem [#allocation12], %s1243
          %1245 = dma.done %s1241, 512
        $region68: #{tpu_custom_call.1} parent=63 // pred_fallthru
          _
      $region64: #{tpu_custom_call.1} parent=5 // pred_fallthru
        _
    $region6: #{tpu_custom_call.1} parent=1 // loop_footer
      %s23 = sadd.s32 1, %s19
    $region7: #{tpu_custom_call.1} parent=1 // loop_footer_branch
      %18 = sbr.rel target = $region3
    $region8: #{tpu_custom_call.1} parent=1 // loop_exit
      _
    %1246 = vsyncpa [#allocation7], 1
    %s1247 = scalar_lea.sflag [#allocation7], 1
    %1248 = vsyncpa %s1247, 1
    %1249 = vsyncpa [#allocation10], 1
    %s1250 = scalar_lea.sflag [#allocation10], 1
    %1251 = vsyncpa %s1250, 1
    %1252 = vsyncpa [#allocation8], 1
    %s1253 = scalar_lea.sflag [#allocation8], 1
    %1254 = vsyncpa %s1253, 1

</llo_original>
